<compile_context>
chip_gen: v5e
topology: v5e:2x2
jax: 0.10.0
libtpu: 0.0.40
codegen_flags: <defaults>
</compile_context>

<pallas_src>
import jax
import jax.numpy as jnp
from jax.experimental import pallas as pl
from jax.experimental.pallas import tpu as pltpu

STATE_DIM = 3
H1 = 1024
H2 = 512
OUT = 1


def _round_up(x, m):
    return ((x + m - 1) // m) * m


def valuenet_kernel(x_ref, w1_ref, b1_ref, w2_ref, b2_ref, w3_ref, b3_ref, o_ref):
    # x_ref:  (BT, 3)       batch tile
    # w1_ref: (3, 1024)     resident, f32
    # b1_ref: (1, 1024)     resident, f32
    # w2_ref: (1024, 512)   resident, bf16 (or f32 if use_bf16=False)
    # b2_ref: (1, 512)      resident, f32
    # w3_ref: (1, 512)      resident, f32 (fc3 weight as a row vector)
    # b3_ref: (1,)          SMEM scalar
    # o_ref:  (BT, 1)
    x = x_ref[...]

    # Layer 1: K=3 matmul on the (otherwise idle) MXU; Mosaic pads K.
    h1 = jnp.dot(x, w1_ref[...], preferred_element_type=jnp.float32) + b1_ref[...]
    h1 = jnp.maximum(h1, 0.0)                                # (BT, 1024), f32

    # Layer 2: the only FLOP-heavy matmul (BT x 1024 x 512). Operands in w2's
    # dtype (bf16 by default -> native MXU rate), f32 accumulation.
    h2 = jnp.dot(h1.astype(w2_ref.dtype), w2_ref[...],
                 preferred_element_type=jnp.float32)
    h2 = jnp.maximum(h2 + b2_ref[...], 0.0)                  # (BT, 512), f32

    # Layer 3 (N=1): VPU multiply, fold the four 128-lane tiles with 3 VPU adds,
    # then a single cross-lane (XLU) reduction (BT,128) -> (BT,1).
    h2w = h2 * w3_ref[...]                                   # (BT, 512)
    folded = (h2w[:, 0:128] + h2w[:, 128:256]
              + h2w[:, 256:384] + h2w[:, 384:512])           # (BT, 128)
    y = jnp.sum(folded, axis=-1, keepdims=True) + b3_ref[0]  # (BT, 1)

    o_ref[...] = y.astype(o_ref.dtype)


def valuenet_forward(x, params, *, block_batch=1024, use_bf16=True):
    w1, b1, w2, b2, w3, b3 = params
    B = x.shape[0]

    # Batch tile selection:
    #  * default 1024 to amortize per-grid-step overhead,
    #  * if B would otherwise fit in a single large tile, split into two so
    #    both TensorCores get work on v7x (the batch axis is "parallel"),
    #  * always a multiple of 8 (f32 sublanes).
    if B > block_batch:
        bt = block_batch
    elif B >= 512:
        bt = _round_up(pl.cdiv(B, 2), 8)     # >= 2 grid steps (v7x megacore)
    else:
        bt = _round_up(B, 8)                 # one small tile
    padded_B = _round_up(B, bt)
    if padded_B != B:
        x = jnp.pad(x, ((0, padded_B - B), (0, 0)))
    grid = (padded_B // bt,)

    # fc3 weight as a lane-dense row vector, fc3 bias as an SMEM scalar.
    w3_row = w3.reshape(1, H2)
    b3_s = b3.reshape(-1)  # (1,)

    # Cast the big weight once in the wrapper (also halves its VMEM footprint).
    w2_in = w2.astype(jnp.bfloat16) if use_bf16 else w2
    w2_bytes_per_elem = 2 if use_bf16 else 4

    # VMEM budget: per-tile activations (h1 f32 + bf16 copy, h2 + layer-3 temps,
    # double-buffered x/out tiles) + resident weights. Floor 32 MiB so bigger
    # tiles don't trip v5e's 16 MiB default scoped limit; cap below v7x's 64 MiB.
    act_bytes = bt * (H1 * 4 + H1 * 2 + H2 * 4 * 3 + STATE_DIM * 4 * 2 + OUT * 4 * 2)
    w_bytes = (STATE_DIM * H1 * 4 + H1 * 4
               + H1 * H2 * w2_bytes_per_elem * 2   # double-buffered allocation
               + H2 * 4 * 4)
    vmem_limit = int(1.2 * (act_bytes + w_bytes)) + (4 << 20)
    vmem_limit = max(32 << 20, min(vmem_limit, 60 << 20))

    flops = 2 * padded_B * (STATE_DIM * H1 + H1 * H2 + H2 * OUT)
    bytes_accessed = (
        4 * (STATE_DIM * H1 + H1 + H2 + H2 * OUT + OUT + padded_B * (STATE_DIM + OUT))
        + w2_bytes_per_elem * H1 * H2
    )

    out = pl.pallas_call(
        valuenet_kernel,
        out_shape=jax.ShapeDtypeStruct((padded_B, OUT), jnp.float32),
        grid=grid,
        in_specs=[
            pl.BlockSpec((bt, STATE_DIM), lambda i: (i, 0)),   # x: tiled over batch
            pl.BlockSpec((STATE_DIM, H1), lambda i: (0, 0)),   # w1: resident
            pl.BlockSpec((1, H1), lambda i: (0, 0)),           # b1: resident
            pl.BlockSpec((H1, H2), lambda i: (0, 0)),          # w2: resident (bf16)
            pl.BlockSpec((1, H2), lambda i: (0, 0)),           # b2: resident
            pl.BlockSpec((1, H2), lambda i: (0, 0)),           # w3 (row): resident
            pl.BlockSpec(memory_space=pltpu.SMEM),             # b3 scalar in SMEM
        ],
        out_specs=pl.BlockSpec((bt, OUT), lambda i: (i, 0)),
        compiler_params=pltpu.CompilerParams(
            dimension_semantics=("parallel",),
            vmem_limit_bytes=vmem_limit,
        ),
        cost_estimate=pl.CostEstimate(
            flops=flops, transcendentals=0, bytes_accessed=bytes_accessed
        ),
    )(x, w1, b1, w2_in, b2, w3_row, b3_s)

    return out[:B]


def init_params(key):
    # Deterministic init mimicking PyTorch nn.Linear default:
    # U(-1/sqrt(fan_in), 1/sqrt(fan_in)) for both weight and bias.
    def linear(key, fan_in, fan_out):
        kw, kb = jax.random.split(key)
        bound = 1.0 / jnp.sqrt(fan_in)
        w = jax.random.uniform(kw, (fan_in, fan_out), jnp.float32, -bound, bound)
        b = jax.random.uniform(kb, (1, fan_out), jnp.float32, -bound, bound)
        return w, b

    k1, k2, k3 = jax.random.split(key, 3)
    w1, b1 = linear(k1, STATE_DIM, H1)
    w2, b2 = linear(k2, H1, H2)
    w3, b3 = linear(k3, H2, OUT)
    return (w1, b1, w2, b2, w3, b3)


def reference_forward(x, params):
    w1, b1, w2, b2, w3, b3 = params
    h1 = jnp.maximum(x @ w1 + b1, 0.0)
    h2 = jnp.maximum(h1 @ w2 + b2, 0.0)
    return h2 @ w3 + b3


if __name__ == "__main__":
    key = jax.random.PRNGKey(0)
    kx, kx2, kp = jax.random.split(key, 3)
    params = init_params(kp)

    # bf16 MXU path deviates slightly from the f32 reference -> loosened tolerance.
    TOL = dict(atol=3e-2, rtol=3e-2)

    # Small batch: single tile.
    batch = 8
    x = jax.random.normal(kx, (batch, STATE_DIM), jnp.float32)
    out = jax.block_until_ready(valuenet_forward(x, params))
    ref = reference_forward(x, params)
    assert out.shape == (batch, OUT), out.shape
    assert jnp.allclose(out, ref, **TOL), float(jnp.max(jnp.abs(out - ref)))

    # Non-multiple batch with a small tile: exercises padding + multi-tile grid.
    batch2 = 300
    x2 = jax.random.normal(kx2, (batch2, STATE_DIM), jnp.float32)
    out2 = jax.block_until_ready(valuenet_forward(x2, params, block_batch=128))
    ref2 = reference_forward(x2, params)
    assert out2.shape == (batch2, OUT), out2.shape
    assert jnp.allclose(out2, ref2, **TOL), float(jnp.max(jnp.abs(out2 - ref2)))

    # f32 (exact PyTorch-semantics) path still available and tighter.
    out3 = jax.block_until_ready(valuenet_forward(x2, params, use_bf16=False))
    assert jnp.allclose(out3, ref2, atol=1e-4, rtol=1e-4), (
        float(jnp.max(jnp.abs(out3 - ref2)))
    )

    print("KERNEL_OK")
</pallas_src>

<mosaic_0001>
module attributes {stable_mosaic.version = 11 : i64} {
  func.func @valuenet_kernel(%arg0: i32, %arg1: memref<8x3xf32, #tpu.memory_space<vmem>>, %arg2: memref<3x1024xf32, #tpu.memory_space<vmem>>, %arg3: memref<1x1024xf32, #tpu.memory_space<vmem>>, %arg4: memref<1024x512xbf16, #tpu.memory_space<vmem>>, %arg5: memref<1x512xf32, #tpu.memory_space<vmem>>, %arg6: memref<1x512xf32, #tpu.memory_space<vmem>>, %arg7: memref<1xf32, #tpu.memory_space<smem>>, %arg8: memref<8x1xf32, #tpu.memory_space<vmem>>) attributes {dimension_semantics = [#tpu.dimension_semantics<parallel>], iteration_bounds = array<i64: 1>, scalar_prefetch = 0 : i64, scratch_operands = 0 : i64, tpu.core_type = #tpu.core_type<tc>, window_params = [{transform_indices = @transform_0, window_bounds = array<i64: 8, 3>}, {pipeline_mode = #tpu.pipeline_mode<synchronous>, transform_indices = @transform_1, window_bounds = array<i64: 3, 1024>}, {pipeline_mode = #tpu.pipeline_mode<synchronous>, transform_indices = @transform_2, window_bounds = array<i64: 1, 1024>}, {pipeline_mode = #tpu.pipeline_mode<synchronous>, transform_indices = @transform_3, window_bounds = array<i64: 1024, 512>}, {pipeline_mode = #tpu.pipeline_mode<synchronous>, transform_indices = @transform_4, window_bounds = array<i64: 1, 512>}, {pipeline_mode = #tpu.pipeline_mode<synchronous>, transform_indices = @transform_5, window_bounds = array<i64: 1, 512>}, {transform_indices = @transform_6, window_bounds = array<i64: 1>}, {transform_indices = @transform_7, window_bounds = array<i64: 8, 1>}]} {
    %c0 = arith.constant 0 : index
    %c0_0 = arith.constant 0 : index
    %0 = vector.load %arg1[%c0, %c0_0] : memref<8x3xf32, #tpu.memory_space<vmem>>, vector<8x3xf32>
    %c0_1 = arith.constant 0 : index
    %c0_2 = arith.constant 0 : index
    %1 = vector.load %arg2[%c0_1, %c0_2] : memref<3x1024xf32, #tpu.memory_space<vmem>>, vector<3x1024xf32>
    %cst = arith.constant dense<0.000000e+00> : vector<8x1024xf32>
    %2 = tpu.matmul %0, %1, %cst {dimension_numbers = #tpu.dot_dimension_numbers<[1], [0], [0], [1], [0, 0, 1, 1], [], []>} : vector<8x3xf32>, vector<3x1024xf32>, vector<8x1024xf32> -> vector<8x1024xf32>
    %c0_3 = arith.constant 0 : index
    %c0_4 = arith.constant 0 : index
    %3 = vector.load %arg3[%c0_3, %c0_4] : memref<1x1024xf32, #tpu.memory_space<vmem>>, vector<1x1024xf32>
    %4 = vector.broadcast %3 : vector<1x1024xf32> to vector<8x1024xf32>
    %5 = arith.addf %2, %4 : vector<8x1024xf32>
    %cst_5 = arith.constant 0.000000e+00 : f32
    %6 = vector.broadcast %cst_5 : f32 to vector<8x1024xf32>
    %7 = arith.maximumf %5, %6 : vector<8x1024xf32>
    %8 = arith.truncf %7 : vector<8x1024xf32> to vector<8x1024xbf16>
    %c0_6 = arith.constant 0 : index
    %c0_7 = arith.constant 0 : index
    %9 = vector.load %arg4[%c0_6, %c0_7] : memref<1024x512xbf16, #tpu.memory_space<vmem>>, vector<1024x512xbf16>
    %cst_8 = arith.constant dense<0.000000e+00> : vector<8x512xf32>
    %10 = tpu.matmul %8, %9, %cst_8 {dimension_numbers = #tpu.dot_dimension_numbers<[1], [0], [0], [1], [0, 0, 1, 1], [], []>} : vector<8x1024xbf16>, vector<1024x512xbf16>, vector<8x512xf32> -> vector<8x512xf32>
    %c0_9 = arith.constant 0 : index
    %c0_10 = arith.constant 0 : index
    %11 = vector.load %arg5[%c0_9, %c0_10] : memref<1x512xf32, #tpu.memory_space<vmem>>, vector<1x512xf32>
    %12 = vector.broadcast %11 : vector<1x512xf32> to vector<8x512xf32>
    %13 = arith.addf %10, %12 : vector<8x512xf32>
    %cst_11 = arith.constant 0.000000e+00 : f32
    %14 = vector.broadcast %cst_11 : f32 to vector<8x512xf32>
    %15 = arith.maximumf %13, %14 : vector<8x512xf32>
    %c0_12 = arith.constant 0 : index
    %c0_13 = arith.constant 0 : index
    %16 = vector.load %arg6[%c0_12, %c0_13] : memref<1x512xf32, #tpu.memory_space<vmem>>, vector<1x512xf32>
    %17 = vector.broadcast %16 : vector<1x512xf32> to vector<8x512xf32>
    %18 = arith.mulf %15, %17 : vector<8x512xf32>
    %19 = vector.extract_strided_slice %18 {offsets = [0, 0], sizes = [8, 128], strides = [1, 1]} : vector<8x512xf32> to vector<8x128xf32>
    %20 = vector.extract_strided_slice %18 {offsets = [0, 128], sizes = [8, 128], strides = [1, 1]} : vector<8x512xf32> to vector<8x128xf32>
    %21 = arith.addf %19, %20 : vector<8x128xf32>
    %22 = vector.extract_strided_slice %18 {offsets = [0, 256], sizes = [8, 128], strides = [1, 1]} : vector<8x512xf32> to vector<8x128xf32>
    %23 = arith.addf %21, %22 : vector<8x128xf32>
    %24 = vector.extract_strided_slice %18 {offsets = [0, 384], sizes = [8, 128], strides = [1, 1]} : vector<8x512xf32> to vector<8x128xf32>
    %25 = arith.addf %23, %24 : vector<8x128xf32>
    %cst_14 = arith.constant dense<0.000000e+00> : vector<8xf32>
    %26 = vector.multi_reduction <add>, %25, %cst_14 [1] : vector<8x128xf32> to vector<8xf32>
    %27 = vector.shape_cast %26 : vector<8xf32> to vector<8x1xf32>
    %c0_15 = arith.constant 0 : index
    %28 = memref.load %arg7[%c0_15] : memref<1xf32, #tpu.memory_space<smem>>
    %29 = vector.broadcast %28 : f32 to vector<8x1xf32>
    %30 = arith.addf %27, %29 : vector<8x1xf32>
    %c0_16 = arith.constant 0 : index
    %c0_17 = arith.constant 0 : index
    %31 = vector.load %arg8[%c0_16, %c0_17] : memref<8x1xf32, #tpu.memory_space<vmem>>, vector<8x1xf32>
    tpu.vector_store %arg8[%c0_16, %c0_17], %30 {strides = array<i32>} : memref<8x1xf32, #tpu.memory_space<vmem>>, vector<8x1xf32>,
    return
  }
  func.func @transform_0(%arg0: i32) -> (i32, i32) {
    %c0_i32 = arith.constant 0 : i32
    %c0_i32_0 = arith.constant 0 : i32
    return %arg0, %c0_i32 : i32, i32
  }
  func.func @transform_1(%arg0: i32) -> (i32, i32) {
    %c0_i32 = arith.constant 0 : i32
    %c0_i32_0 = arith.constant 0 : i32
    %c0_i32_1 = arith.constant 0 : i32
    return %c0_i32, %c0_i32_0 : i32, i32
  }
  func.func @transform_2(%arg0: i32) -> (i32, i32) {
    %c0_i32 = arith.constant 0 : i32
    %c0_i32_0 = arith.constant 0 : i32
    %c0_i32_1 = arith.constant 0 : i32
    return %c0_i32, %c0_i32_0 : i32, i32
  }
  func.func @transform_3(%arg0: i32) -> (i32, i32) {
    %c0_i32 = arith.constant 0 : i32
    %c0_i32_0 = arith.constant 0 : i32
    %c0_i32_1 = arith.constant 0 : i32
    return %c0_i32, %c0_i32_0 : i32, i32
  }
  func.func @transform_4(%arg0: i32) -> (i32, i32) {
    %c0_i32 = arith.constant 0 : i32
    %c0_i32_0 = arith.constant 0 : i32
    %c0_i32_1 = arith.constant 0 : i32
    return %c0_i32, %c0_i32_0 : i32, i32
  }
  func.func @transform_5(%arg0: i32) -> (i32, i32) {
    %c0_i32 = arith.constant 0 : i32
    %c0_i32_0 = arith.constant 0 : i32
    %c0_i32_1 = arith.constant 0 : i32
    return %c0_i32, %c0_i32_0 : i32, i32
  }
  func.func @transform_6(%arg0: i32) -> i32 {
    %c0_i32 = arith.constant 0 : i32
    %c0_i32_0 = arith.constant 0 : i32
    return %c0_i32 : i32
  }
  func.func @transform_7(%arg0: i32) -> (i32, i32) {
    %c0_i32 = arith.constant 0 : i32
    %c0_i32_0 = arith.constant 0 : i32
    return %arg0, %c0_i32 : i32, i32
  }
}

</mosaic_0001>

<llo_original>
// kernel: tpu_custom_call.1
$region0: #{tpu_custom_call.1}
  #allocation0 [shape = 'u32[]', space=smem, size = 0x4, offset = 0x4, fixed_abs, tag = 'smem constant byte address 0x4 - core index']
  #allocation1 [shape = 'u32[72,128]{1,0:T(1,128)}', space=vmem, size = 0x9000, scoped, tag = 'internal scratch']
  #allocation2 [shape = 'f32[1]{0:T(128)S(6)}', space=smem, size = 0x200, scoped, tag = 'scoped memory for tpu_custom_call.1']
  %s0 = inlined_call_operand.vmem [shape: f32[8,3], index: 0, kind: input, shape index: {}]
  %s1 = inlined_call_operand.hbm [shape: f32[3,1024], index: 1, kind: input, shape index: {}]
  %s2 = inlined_call_operand.vmem [shape: f32[1,1024], index: 2, kind: input, shape index: {}]
  %s3 = inlined_call_operand.hbm [shape: bf16[1024,512], index: 3, kind: input, shape index: {}]
  %s4 = inlined_call_operand.vmem [shape: f32[1,512], index: 4, kind: input, shape index: {}]
  %s5 = inlined_call_operand.vmem [shape: f32[1,512], index: 5, kind: input, shape index: {}]
  %s6 = inlined_call_operand.<no memory space> [shape: f32[1], index: 6, kind: input, shape index: {}]
  %s7 = inlined_call_operand.vmem [shape: f32[8,1], index: 7, kind: output, shape index: {}]
  %s8 = sld [smem:[#allocation0]]
  $region46: #{tpu_custom_call.1} parent=0
    _
  %s10 = ssub.s32 1, %s8
  %s11 = scalar_select 0, %s10, %s8
  %12 = sst [smem:[#allocation2]] %s6
  $region1: #{tpu_custom_call.1} parent=0
    #allocation3 [shape = 'u8[16384]{0}', space=vmem, size = 0x4000, scoped, tag = 'input window, operand 1, single buffered']
    #allocation4 [shape = 's32[1]{0}', space=sflag, size = 0x4, scoped, tag = 'scoped memory for tpu_custom_call.1']
    #allocation5 [shape = 'u8[1048576]{0}', space=vmem, size = 0x100000, scoped, tag = 'input window, operand 3, single buffered']
    #allocation6 [shape = 's32[1]{0}', space=sflag, size = 0x4, scoped, tag = 'scoped memory for tpu_custom_call.1']
    %13 = vsyncpa [#allocation4], 0
    %14 = vsyncpa [#allocation6], 0
    // Predicated region
    $region2: #{tpu_custom_call.1} parent=1 // pred_check
      _
    $region3: #{tpu_custom_call.1} parent=1 // pred_check_branch
      %16 = sbr.rel (0) target = $region5
    $region4: #{tpu_custom_call.1} parent=1 // pred_region
      _
    $region5: #{tpu_custom_call.1} parent=1 // pred_fallthru
      _
    // Predicated region
    $region6: #{tpu_custom_call.1} parent=1 // pred_check
      _
    $region7: #{tpu_custom_call.1} parent=1 // pred_check_branch
      %18 = sbr.rel (0) target = $region9
    $region8: #{tpu_custom_call.1} parent=1 // pred_region
      %20 = vsyncadd [#allocation4], 0
      %s22 = sshll.u32 %s1, 4
      %s23 = int_to_ptr.hbm [resolvable:$true] %s22
      %s24 = sshll.u32 [#allocation3], 4
      %s25 = int_to_ptr.vmem [resolvable:$true] %s24
      %27 = dma.hbm_to_vmem [thread:$0]  %s23, 512, %s25, [#allocation4]
    $region9: #{tpu_custom_call.1} parent=1 // pred_fallthru
      _
    // Predicated region
    $region10: #{tpu_custom_call.1} parent=1 // pred_check
      _
    $region11: #{tpu_custom_call.1} parent=1 // pred_check_branch
      %29 = sbr.rel (0) target = $region13
    $region12: #{tpu_custom_call.1} parent=1 // pred_region
      _
    $region13: #{tpu_custom_call.1} parent=1 // pred_fallthru
      _
    // Predicated region
    $region14: #{tpu_custom_call.1} parent=1 // pred_check
      _
    $region15: #{tpu_custom_call.1} parent=1 // pred_check_branch
      %31 = sbr.rel (0) target = $region17
    $region16: #{tpu_custom_call.1} parent=1 // pred_region
      %33 = vsyncadd [#allocation6], 0
      %s34 = sshll.u32 %s3, 4
      %s35 = int_to_ptr.hbm [resolvable:$true] %s34
      %s36 = sshll.u32 [#allocation5], 4
      %s37 = int_to_ptr.vmem [resolvable:$true] %s36
      %42 = dma.hbm_to_vmem [thread:$0]  %s35, 32768, %s37, [#allocation6], 256, 256, 16
    $region17: #{tpu_custom_call.1} parent=1 // pred_fallthru
      _
    // Predicated region
    $region18: #{tpu_custom_call.1} parent=1 // pred_check
      _
    $region19: #{tpu_custom_call.1} parent=1 // pred_check_branch
      %44 = sbr.rel (0) target = $region21
    $region20: #{tpu_custom_call.1} parent=1 // pred_region
      _
    $region21: #{tpu_custom_call.1} parent=1 // pred_fallthru
      _
    // Predicated region
    $region22: #{tpu_custom_call.1} parent=1 // pred_check
      _
    $region23: #{tpu_custom_call.1} parent=1 // pred_check_branch
      %46 = sbr.rel (0) target = $region25
    $region24: #{tpu_custom_call.1} parent=1 // pred_region
      _
    $region25: #{tpu_custom_call.1} parent=1 // pred_fallthru
      _
    // Predicated region
    $region26: #{tpu_custom_call.1} parent=1 // pred_check
      _
    $region27: #{tpu_custom_call.1} parent=1 // pred_check_branch
      %48 = sbr.rel (0) target = $region29
    $region28: #{tpu_custom_call.1} parent=1 // pred_region
      _
    $region29: #{tpu_custom_call.1} parent=1 // pred_fallthru
      _
    // Predicated region
    $region30: #{tpu_custom_call.1} parent=1 // pred_check
      _
    $region31: #{tpu_custom_call.1} parent=1 // pred_check_branch
      %50 = sbr.rel (0) target = $region33
    $region32: #{tpu_custom_call.1} parent=1 // pred_region
      %52 = dma.done [#allocation4], 512
    $region33: #{tpu_custom_call.1} parent=1 // pred_fallthru
      _
    // Predicated region
    $region34: #{tpu_custom_call.1} parent=1 // pred_check
      _
    $region35: #{tpu_custom_call.1} parent=1 // pred_check_branch
      %54 = sbr.rel (0) target = $region37
    $region36: #{tpu_custom_call.1} parent=1 // pred_region
      %56 = dma.done [#allocation6], 32768
    $region37: #{tpu_custom_call.1} parent=1 // pred_fallthru
      _
    %v57 = vld [vmem:[%s0] sm:$0xff]
    %v58 = vld [vmem:[#allocation3] sm:$0x77]
    %v59 = vld [vmem:[#allocation3 + $0x8] sm:$0x77]
    %v60 = vld [vmem:[#allocation3 + $0x10] sm:$0x77]
    %v61 = vld [vmem:[#allocation3 + $0x18] sm:$0x77]
    %v62 = vld [vmem:[%s2] sm:$0xff]
    %v64 = vperm.slane %v62, 0
    %v65 = vperm.slane %v62, 1
    %v66 = vperm.slane %v62, 2
    %v67 = vperm.slane %v62, 3
    %v68 = vperm.slane %v62, 4
    %v69 = vperm.slane %v62, 5
    %v70 = vperm.slane %v62, 6
    %v71 = vperm.slane %v62, 7
    %84 = vst [vmem:[#allocation1] ss:$2 sm:$0xff] %v58
    %s85 = scalar_lea.vmem [#allocation1], 16
    %86 = vst [vmem:[%s85] ss:$2 sm:$0xff] %v59
    %s87 = scalar_lea.vmem [#allocation1], 32
    %88 = vst [vmem:[%s87] ss:$2 sm:$0xff] %v60
    %s89 = scalar_lea.vmem [#allocation1], 48
    %90 = vst [vmem:[%s89] ss:$2 sm:$0xff] %v61
    %v91 = vld.sshfl [vmem:[#allocation1] sm:$0xff pattern:$0x75316420]
    %v92 = vld.sshfl [vmem:[#allocation1 + $0x8] sm:$0xff pattern:$0x75316420]
    %v93 = vld.sshfl [vmem:[#allocation1 + $0x10] sm:$0xff pattern:$0x75316420]
    %v94 = vld.sshfl [vmem:[#allocation1 + $0x18] sm:$0xff pattern:$0x75316420]
    %v95 = vld.sshfl [vmem:[#allocation1 + $0x20] sm:$0xff pattern:$0x75316420]
    %v96 = vld.sshfl [vmem:[#allocation1 + $0x28] sm:$0xff pattern:$0x75316420]
    %v97 = vld.sshfl [vmem:[#allocation1 + $0x30] sm:$0xff pattern:$0x75316420]
    %v98 = vld.sshfl [vmem:[#allocation1 + $0x38] sm:$0xff pattern:$0x75316420]
    %vm99 = vcmask 23552
    %v101 = vsel %vm99, %v57, 0
    %vm103 = vcmask 1042432
    %v104 = vsel %vm103, %v91, 0
    %v106 = vsel %vm103, %v92, 0
    %v108 = vsel %vm103, %v93, 0
    %v110 = vsel %vm103, %v94, 0
    %v112 = vsel %vm103, %v95, 0
    %v114 = vsel %vm103, %v96, 0
    %v116 = vsel %vm103, %v97, 0
    %v118 = vsel %vm103, %v98, 0
    %120 = vmatpush.msra.mxu0 0.0
    %121 = vmatpush.msra.mxu0 0.0
    %122 = vmatpush.msra.mxu0 0.0
    %123 = vmatpush.msra.mxu0 0.0
    %124 = vmatpush.msra.mxu0 0.0
    %125 = vmatpush.msra.mxu0 0.0
    %126 = vmatpush.msra.mxu0 0.0
    %127 = vmatpush.msra.mxu0 0.0
    %128 = vmatpush.msra.mxu0 0.0
    %129 = vmatpush.msra.mxu0 0.0
    %130 = vmatpush.msra.mxu0 0.0
    %131 = vmatpush.msra.mxu0 0.0
    %132 = vmatpush.msra.mxu0 0.0
    %133 = vmatpush.msra.mxu0 0.0
    %134 = vmatpush.msra.mxu0 0.0
    %135 = vmatpush.msra.mxu0 %v104
    %136 = vmatmul.f32.gmra.mxu0 %v101
    %v137 = vpop.f32.mrf.mxu0
    %v138 = vadd.f32 %v64, %v137
    %139 = vdwg.mxu0
    %140 = vmatpush.msra.mxu0 0.0
    %141 = vmatpush.msra.mxu0 0.0
    %142 = vmatpush.msra.mxu0 0.0
    %143 = vmatpush.msra.mxu0 0.0
    %144 = vmatpush.msra.mxu0 0.0
    %145 = vmatpush.msra.mxu0 0.0
    %146 = vmatpush.msra.mxu0 0.0
    %147 = vmatpush.msra.mxu0 0.0
    %148 = vmatpush.msra.mxu0 0.0
    %149 = vmatpush.msra.mxu0 0.0
    %150 = vmatpush.msra.mxu0 0.0
    %151 = vmatpush.msra.mxu0 0.0
    %152 = vmatpush.msra.mxu0 0.0
    %153 = vmatpush.msra.mxu0 0.0
    %154 = vmatpush.msra.mxu0 0.0
    %155 = vmatpush.msra.mxu0 %v106
    %156 = vmatmul.f32.gmra.mxu0 %v101
    %v157 = vpop.f32.mrf.mxu0
    %v158 = vadd.f32 %v65, %v157
    %159 = vdwg.mxu0
    %160 = vmatpush.msra.mxu0 0.0
    %161 = vmatpush.msra.mxu0 0.0
    %162 = vmatpush.msra.mxu0 0.0
    %163 = vmatpush.msra.mxu0 0.0
    %164 = vmatpush.msra.mxu0 0.0
    %165 = vmatpush.msra.mxu0 0.0
    %166 = vmatpush.msra.mxu0 0.0
    %167 = vmatpush.msra.mxu0 0.0
    %168 = vmatpush.msra.mxu0 0.0
    %169 = vmatpush.msra.mxu0 0.0
    %170 = vmatpush.msra.mxu0 0.0
    %171 = vmatpush.msra.mxu0 0.0
    %172 = vmatpush.msra.mxu0 0.0
    %173 = vmatpush.msra.mxu0 0.0
    %174 = vmatpush.msra.mxu0 0.0
    %175 = vmatpush.msra.mxu0 %v108
    %176 = vmatmul.f32.gmra.mxu0 %v101
    %v177 = vpop.f32.mrf.mxu0
    %v178 = vadd.f32 %v66, %v177
    %179 = vdwg.mxu0
    %180 = vmatpush.msra.mxu0 0.0
    %181 = vmatpush.msra.mxu0 0.0
    %182 = vmatpush.msra.mxu0 0.0
    %183 = vmatpush.msra.mxu0 0.0
    %184 = vmatpush.msra.mxu0 0.0
    %185 = vmatpush.msra.mxu0 0.0
    %186 = vmatpush.msra.mxu0 0.0
    %187 = vmatpush.msra.mxu0 0.0
    %188 = vmatpush.msra.mxu0 0.0
    %189 = vmatpush.msra.mxu0 0.0
    %190 = vmatpush.msra.mxu0 0.0
    %191 = vmatpush.msra.mxu0 0.0
    %192 = vmatpush.msra.mxu0 0.0
    %193 = vmatpush.msra.mxu0 0.0
    %194 = vmatpush.msra.mxu0 0.0
    %195 = vmatpush.msra.mxu0 %v110
    %196 = vmatmul.f32.gmra.mxu0 %v101
    %v197 = vpop.f32.mrf.mxu0
    %v198 = vadd.f32 %v67, %v197
    %199 = vdwg.mxu0
    %200 = vmatpush.msra.mxu0 0.0
    %201 = vmatpush.msra.mxu0 0.0
    %202 = vmatpush.msra.mxu0 0.0
    %203 = vmatpush.msra.mxu0 0.0
    %204 = vmatpush.msra.mxu0 0.0
    %205 = vmatpush.msra.mxu0 0.0
    %206 = vmatpush.msra.mxu0 0.0
    %207 = vmatpush.msra.mxu0 0.0
    %208 = vmatpush.msra.mxu0 0.0
    %209 = vmatpush.msra.mxu0 0.0
    %210 = vmatpush.msra.mxu0 0.0
    %211 = vmatpush.msra.mxu0 0.0
    %212 = vmatpush.msra.mxu0 0.0
    %213 = vmatpush.msra.mxu0 0.0
    %214 = vmatpush.msra.mxu0 0.0
    %215 = vmatpush.msra.mxu0 %v112
    %216 = vmatmul.f32.gmra.mxu0 %v101
    %v217 = vpop.f32.mrf.mxu0
    %v218 = vadd.f32 %v68, %v217
    %219 = vdwg.mxu0
    %220 = vmatpush.msra.mxu0 0.0
    %221 = vmatpush.msra.mxu0 0.0
    %222 = vmatpush.msra.mxu0 0.0
    %223 = vmatpush.msra.mxu0 0.0
    %224 = vmatpush.msra.mxu0 0.0
    %225 = vmatpush.msra.mxu0 0.0
    %226 = vmatpush.msra.mxu0 0.0
    %227 = vmatpush.msra.mxu0 0.0
    %228 = vmatpush.msra.mxu0 0.0
    %229 = vmatpush.msra.mxu0 0.0
    %230 = vmatpush.msra.mxu0 0.0
    %231 = vmatpush.msra.mxu0 0.0
    %232 = vmatpush.msra.mxu0 0.0
    %233 = vmatpush.msra.mxu0 0.0
    %234 = vmatpush.msra.mxu0 0.0
    %235 = vmatpush.msra.mxu0 %v114
    %236 = vmatmul.f32.gmra.mxu0 %v101
    %v237 = vpop.f32.mrf.mxu0
    %v238 = vadd.f32 %v69, %v237
    %239 = vdwg.mxu0
    %240 = vmatpush.msra.mxu0 0.0
    %241 = vmatpush.msra.mxu0 0.0
    %242 = vmatpush.msra.mxu0 0.0
    %243 = vmatpush.msra.mxu0 0.0
    %244 = vmatpush.msra.mxu0 0.0
    %245 = vmatpush.msra.mxu0 0.0
    %246 = vmatpush.msra.mxu0 0.0
    %247 = vmatpush.msra.mxu0 0.0
    %248 = vmatpush.msra.mxu0 0.0
    %249 = vmatpush.msra.mxu0 0.0
    %250 = vmatpush.msra.mxu0 0.0
    %251 = vmatpush.msra.mxu0 0.0
    %252 = vmatpush.msra.mxu0 0.0
    %253 = vmatpush.msra.mxu0 0.0
    %254 = vmatpush.msra.mxu0 0.0
    %255 = vmatpush.msra.mxu0 %v116
    %256 = vmatmul.f32.gmra.mxu0 %v101
    %v257 = vpop.f32.mrf.mxu0
    %v258 = vadd.f32 %v70, %v257
    %259 = vdwg.mxu0
    %260 = vmatpush.msra.mxu0 0.0
    %261 = vmatpush.msra.mxu0 0.0
    %262 = vmatpush.msra.mxu0 0.0
    %263 = vmatpush.msra.mxu0 0.0
    %264 = vmatpush.msra.mxu0 0.0
    %265 = vmatpush.msra.mxu0 0.0
    %266 = vmatpush.msra.mxu0 0.0
    %267 = vmatpush.msra.mxu0 0.0
    %268 = vmatpush.msra.mxu0 0.0
    %269 = vmatpush.msra.mxu0 0.0
    %270 = vmatpush.msra.mxu0 0.0
    %271 = vmatpush.msra.mxu0 0.0
    %272 = vmatpush.msra.mxu0 0.0
    %273 = vmatpush.msra.mxu0 0.0
    %274 = vmatpush.msra.mxu0 0.0
    %275 = vmatpush.msra.mxu0 %v118
    %276 = vmatmul.f32.gmra.mxu0 %v101
    %v277 = vpop.f32.mrf.mxu0
    %v278 = vadd.f32 %v71, %v277
    %279 = vdwg.mxu0
    %v280 = vmax.f32 %v138, 0.0
    %v281 = vmax.f32 %v158, 0.0
    %v282 = vmax.f32 %v178, 0.0
    %v283 = vmax.f32 %v198, 0.0
    %v284 = vmax.f32 %v218, 0.0
    %v285 = vmax.f32 %v238, 0.0
    %v286 = vmax.f32 %v258, 0.0
    %v287 = vmax.f32 %v278, 0.0
    %v288 = vpack.c.bf16 %v280, %v280
    %v289 = vpack.c.bf16 %v281, %v281
    %v290 = vpack.c.bf16 %v282, %v282
    %v291 = vpack.c.bf16 %v283, %v283
    %v292 = vpack.c.bf16 %v284, %v284
    %v293 = vpack.c.bf16 %v285, %v285
    %v294 = vpack.c.bf16 %v286, %v286
    %v295 = vpack.c.bf16 %v287, %v287
    %v296 = vld [vmem:[#allocation5] sm:$0xff]
    %v297 = vld [vmem:[#allocation5 + $0x8] sm:$0xff]
    %v298 = vld [vmem:[#allocation5 + $0x10] sm:$0xff]
    %v299 = vld [vmem:[#allocation5 + $0x18] sm:$0xff]
    %v300 = vld [vmem:[#allocation5 + $0x20] sm:$0xff]
    %v301 = vld [vmem:[#allocation5 + $0x28] sm:$0xff]
    %v302 = vld [vmem:[#allocation5 + $0x30] sm:$0xff]
    %v303 = vld [vmem:[#allocation5 + $0x38] sm:$0xff]
    %v304 = vld [vmem:[#allocation5 + $0x40] sm:$0xff]
    %v305 = vld [vmem:[#allocation5 + $0x48] sm:$0xff]
    %v306 = vld [vmem:[#allocation5 + $0x50] sm:$0xff]
    %v307 = vld [vmem:[#allocation5 + $0x58] sm:$0xff]
    %v308 = vld [vmem:[#allocation5 + $0x60] sm:$0xff]
    %v309 = vld [vmem:[#allocation5 + $0x68] sm:$0xff]
    %v310 = vld [vmem:[#allocation5 + $0x70] sm:$0xff]
    %v311 = vld [vmem:[#allocation5 + $0x78] sm:$0xff]
    %v312 = vld [vmem:[#allocation5 + $0x80] sm:$0xff]
    %v313 = vld [vmem:[#allocation5 + $0x88] sm:$0xff]
    %v314 = vld [vmem:[#allocation5 + $0x90] sm:$0xff]
    %v315 = vld [vmem:[#allocation5 + $0x98] sm:$0xff]
    %v316 = vld [vmem:[#allocation5 + $0xa0] sm:$0xff]
    %v317 = vld [vmem:[#allocation5 + $0xa8] sm:$0xff]
    %v318 = vld [vmem:[#allocation5 + $0xb0] sm:$0xff]
    %v319 = vld [vmem:[#allocation5 + $0xb8] sm:$0xff]
    %v320 = vld [vmem:[#allocation5 + $0xc0] sm:$0xff]
    %v321 = vld [vmem:[#allocation5 + $0xc8] sm:$0xff]
    %v322 = vld [vmem:[#allocation5 + $0xd0] sm:$0xff]
    %v323 = vld [vmem:[#allocation5 + $0xd8] sm:$0xff]
    %v324 = vld [vmem:[#allocation5 + $0xe0] sm:$0xff]
    %v325 = vld [vmem:[#allocation5 + $0xe8] sm:$0xff]
    %v326 = vld [vmem:[#allocation5 + $0xf0] sm:$0xff]
    %v327 = vld [vmem:[#allocation5 + $0xf8] sm:$0xff]
    %v328 = vld [vmem:[#allocation5 + $0x100] sm:$0xff]
    %v329 = vld [vmem:[#allocation5 + $0x108] sm:$0xff]
    %v330 = vld [vmem:[#allocation5 + $0x110] sm:$0xff]
    %v331 = vld [vmem:[#allocation5 + $0x118] sm:$0xff]
    %v332 = vld [vmem:[#allocation5 + $0x120] sm:$0xff]
    %v333 = vld [vmem:[#allocation5 + $0x128] sm:$0xff]
    %v334 = vld [vmem:[#allocation5 + $0x130] sm:$0xff]
    %v335 = vld [vmem:[#allocation5 + $0x138] sm:$0xff]
    %v336 = vld [vmem:[#allocation5 + $0x140] sm:$0xff]
    %v337 = vld [vmem:[#allocation5 + $0x148] sm:$0xff]
    %v338 = vld [vmem:[#allocation5 + $0x150] sm:$0xff]
    %v339 = vld [vmem:[#allocation5 + $0x158] sm:$0xff]
    %v340 = vld [vmem:[#allocation5 + $0x160] sm:$0xff]
    %v341 = vld [vmem:[#allocation5 + $0x168] sm:$0xff]
    %v342 = vld [vmem:[#allocation5 + $0x170] sm:$0xff]
    %v343 = vld [vmem:[#allocation5 + $0x178] sm:$0xff]
    %v344 = vld [vmem:[#allocation5 + $0x180] sm:$0xff]
    %v345 = vld [vmem:[#allocation5 + $0x188] sm:$0xff]
    %v346 = vld [vmem:[#allocation5 + $0x190] sm:$0xff]
    %v347 = vld [vmem:[#allocation5 + $0x198] sm:$0xff]
    %v348 = vld [vmem:[#allocation5 + $0x1a0] sm:$0xff]
    %v349 = vld [vmem:[#allocation5 + $0x1a8] sm:$0xff]
    %v350 = vld [vmem:[#allocation5 + $0x1b0] sm:$0xff]
    %v351 = vld [vmem:[#allocation5 + $0x1b8] sm:$0xff]
    %v352 = vld [vmem:[#allocation5 + $0x1c0] sm:$0xff]
    %v353 = vld [vmem:[#allocation5 + $0x1c8] sm:$0xff]
    %v354 = vld [vmem:[#allocation5 + $0x1d0] sm:$0xff]
    %v355 = vld [vmem:[#allocation5 + $0x1d8] sm:$0xff]
    %v356 = vld [vmem:[#allocation5 + $0x1e0] sm:$0xff]
    %v357 = vld [vmem:[#allocation5 + $0x1e8] sm:$0xff]
    %v358 = vld [vmem:[#allocation5 + $0x1f0] sm:$0xff]
    %v359 = vld [vmem:[#allocation5 + $0x1f8] sm:$0xff]
    %v360 = vld [vmem:[#allocation5 + $0x200] sm:$0xff]
    %v361 = vld [vmem:[#allocation5 + $0x208] sm:$0xff]
    %v362 = vld [vmem:[#allocation5 + $0x210] sm:$0xff]
    %v363 = vld [vmem:[#allocation5 + $0x218] sm:$0xff]
    %v364 = vld [vmem:[#allocation5 + $0x220] sm:$0xff]
    %v365 = vld [vmem:[#allocation5 + $0x228] sm:$0xff]
    %v366 = vld [vmem:[#allocation5 + $0x230] sm:$0xff]
    %v367 = vld [vmem:[#allocation5 + $0x238] sm:$0xff]
    %v368 = vld [vmem:[#allocation5 + $0x240] sm:$0xff]
    %v369 = vld [vmem:[#allocation5 + $0x248] sm:$0xff]
    %v370 = vld [vmem:[#allocation5 + $0x250] sm:$0xff]
    %v371 = vld [vmem:[#allocation5 + $0x258] sm:$0xff]
    %v372 = vld [vmem:[#allocation5 + $0x260] sm:$0xff]
    %v373 = vld [vmem:[#allocation5 + $0x268] sm:$0xff]
    %v374 = vld [vmem:[#allocation5 + $0x270] sm:$0xff]
    %v375 = vld [vmem:[#allocation5 + $0x278] sm:$0xff]
    %v376 = vld [vmem:[#allocation5 + $0x280] sm:$0xff]
    %v377 = vld [vmem:[#allocation5 + $0x288] sm:$0xff]
    %v378 = vld [vmem:[#allocation5 + $0x290] sm:$0xff]
    %v379 = vld [vmem:[#allocation5 + $0x298] sm:$0xff]
    %v380 = vld [vmem:[#allocation5 + $0x2a0] sm:$0xff]
    %v381 = vld [vmem:[#allocation5 + $0x2a8] sm:$0xff]
    %v382 = vld [vmem:[#allocation5 + $0x2b0] sm:$0xff]
    %v383 = vld [vmem:[#allocation5 + $0x2b8] sm:$0xff]
    %v384 = vld [vmem:[#allocation5 + $0x2c0] sm:$0xff]
    %v385 = vld [vmem:[#allocation5 + $0x2c8] sm:$0xff]
    %v386 = vld [vmem:[#allocation5 + $0x2d0] sm:$0xff]
    %v387 = vld [vmem:[#allocation5 + $0x2d8] sm:$0xff]
    %v388 = vld [vmem:[#allocation5 + $0x2e0] sm:$0xff]
    %v389 = vld [vmem:[#allocation5 + $0x2e8] sm:$0xff]
    %v390 = vld [vmem:[#allocation5 + $0x2f0] sm:$0xff]
    %v391 = vld [vmem:[#allocation5 + $0x2f8] sm:$0xff]
    %v392 = vld [vmem:[#allocation5 + $0x300] sm:$0xff]
    %v393 = vld [vmem:[#allocation5 + $0x308] sm:$0xff]
    %v394 = vld [vmem:[#allocation5 + $0x310] sm:$0xff]
    %v395 = vld [vmem:[#allocation5 + $0x318] sm:$0xff]
    %v396 = vld [vmem:[#allocation5 + $0x320] sm:$0xff]
    %v397 = vld [vmem:[#allocation5 + $0x328] sm:$0xff]
    %v398 = vld [vmem:[#allocation5 + $0x330] sm:$0xff]
    %v399 = vld [vmem:[#allocation5 + $0x338] sm:$0xff]
    %v400 = vld [vmem:[#allocation5 + $0x340] sm:$0xff]
    %v401 = vld [vmem:[#allocation5 + $0x348] sm:$0xff]
    %v402 = vld [vmem:[#allocation5 + $0x350] sm:$0xff]
    %v403 = vld [vmem:[#allocation5 + $0x358] sm:$0xff]
    %v404 = vld [vmem:[#allocation5 + $0x360] sm:$0xff]
    %v405 = vld [vmem:[#allocation5 + $0x368] sm:$0xff]
    %v406 = vld [vmem:[#allocation5 + $0x370] sm:$0xff]
    %v407 = vld [vmem:[#allocation5 + $0x378] sm:$0xff]
    %v408 = vld [vmem:[#allocation5 + $0x380] sm:$0xff]
    %v409 = vld [vmem:[#allocation5 + $0x388] sm:$0xff]
    %v410 = vld [vmem:[#allocation5 + $0x390] sm:$0xff]
    %v411 = vld [vmem:[#allocation5 + $0x398] sm:$0xff]
    %v412 = vld [vmem:[#allocation5 + $0x3a0] sm:$0xff]
    %v413 = vld [vmem:[#allocation5 + $0x3a8] sm:$0xff]
    %v414 = vld [vmem:[#allocation5 + $0x3b0] sm:$0xff]
    %v415 = vld [vmem:[#allocation5 + $0x3b8] sm:$0xff]
    %v416 = vld [vmem:[#allocation5 + $0x3c0] sm:$0xff]
    %v417 = vld [vmem:[#allocation5 + $0x3c8] sm:$0xff]
    %v418 = vld [vmem:[#allocation5 + $0x3d0] sm:$0xff]
    %v419 = vld [vmem:[#allocation5 + $0x3d8] sm:$0xff]
    %v420 = vld [vmem:[#allocation5 + $0x3e0] sm:$0xff]
    %v421 = vld [vmem:[#allocation5 + $0x3e8] sm:$0xff]
    %v422 = vld [vmem:[#allocation5 + $0x3f0] sm:$0xff]
    %v423 = vld [vmem:[#allocation5 + $0x3f8] sm:$0xff]
    %v424 = vld [vmem:[#allocation5 + $0x400] sm:$0xff]
    %v425 = vld [vmem:[#allocation5 + $0x408] sm:$0xff]
    %v426 = vld [vmem:[#allocation5 + $0x410] sm:$0xff]
    %v427 = vld [vmem:[#allocation5 + $0x418] sm:$0xff]
    %v428 = vld [vmem:[#allocation5 + $0x420] sm:$0xff]
    %v429 = vld [vmem:[#allocation5 + $0x428] sm:$0xff]
    %v430 = vld [vmem:[#allocation5 + $0x430] sm:$0xff]
    %v431 = vld [vmem:[#allocation5 + $0x438] sm:$0xff]
    %v432 = vld [vmem:[#allocation5 + $0x440] sm:$0xff]
    %v433 = vld [vmem:[#allocation5 + $0x448] sm:$0xff]
    %v434 = vld [vmem:[#allocation5 + $0x450] sm:$0xff]
    %v435 = vld [vmem:[#allocation5 + $0x458] sm:$0xff]
    %v436 = vld [vmem:[#allocation5 + $0x460] sm:$0xff]
    %v437 = vld [vmem:[#allocation5 + $0x468] sm:$0xff]
    %v438 = vld [vmem:[#allocation5 + $0x470] sm:$0xff]
    %v439 = vld [vmem:[#allocation5 + $0x478] sm:$0xff]
    %v440 = vld [vmem:[#allocation5 + $0x480] sm:$0xff]
    %v441 = vld [vmem:[#allocation5 + $0x488] sm:$0xff]
    %v442 = vld [vmem:[#allocation5 + $0x490] sm:$0xff]
    %v443 = vld [vmem:[#allocation5 + $0x498] sm:$0xff]
    %v444 = vld [vmem:[#allocation5 + $0x4a0] sm:$0xff]
    %v445 = vld [vmem:[#allocation5 + $0x4a8] sm:$0xff]
    %v446 = vld [vmem:[#allocation5 + $0x4b0] sm:$0xff]
    %v447 = vld [vmem:[#allocation5 + $0x4b8] sm:$0xff]
    %v448 = vld [vmem:[#allocation5 + $0x4c0] sm:$0xff]
    %v449 = vld [vmem:[#allocation5 + $0x4c8] sm:$0xff]
    %v450 = vld [vmem:[#allocation5 + $0x4d0] sm:$0xff]
    %v451 = vld [vmem:[#allocation5 + $0x4d8] sm:$0xff]
    %v452 = vld [vmem:[#allocation5 + $0x4e0] sm:$0xff]
    %v453 = vld [vmem:[#allocation5 + $0x4e8] sm:$0xff]
    %v454 = vld [vmem:[#allocation5 + $0x4f0] sm:$0xff]
    %v455 = vld [vmem:[#allocation5 + $0x4f8] sm:$0xff]
    %v456 = vld [vmem:[#allocation5 + $0x500] sm:$0xff]
    %v457 = vld [vmem:[#allocation5 + $0x508] sm:$0xff]
    %v458 = vld [vmem:[#allocation5 + $0x510] sm:$0xff]
    %v459 = vld [vmem:[#allocation5 + $0x518] sm:$0xff]
    %v460 = vld [vmem:[#allocation5 + $0x520] sm:$0xff]
    %v461 = vld [vmem:[#allocation5 + $0x528] sm:$0xff]
    %v462 = vld [vmem:[#allocation5 + $0x530] sm:$0xff]
    %v463 = vld [vmem:[#allocation5 + $0x538] sm:$0xff]
    %v464 = vld [vmem:[#allocation5 + $0x540] sm:$0xff]
    %v465 = vld [vmem:[#allocation5 + $0x548] sm:$0xff]
    %v466 = vld [vmem:[#allocation5 + $0x550] sm:$0xff]
    %v467 = vld [vmem:[#allocation5 + $0x558] sm:$0xff]
    %v468 = vld [vmem:[#allocation5 + $0x560] sm:$0xff]
    %v469 = vld [vmem:[#allocation5 + $0x568] sm:$0xff]
    %v470 = vld [vmem:[#allocation5 + $0x570] sm:$0xff]
    %v471 = vld [vmem:[#allocation5 + $0x578] sm:$0xff]
    %v472 = vld [vmem:[#allocation5 + $0x580] sm:$0xff]
    %v473 = vld [vmem:[#allocation5 + $0x588] sm:$0xff]
    %v474 = vld [vmem:[#allocation5 + $0x590] sm:$0xff]
    %v475 = vld [vmem:[#allocation5 + $0x598] sm:$0xff]
    %v476 = vld [vmem:[#allocation5 + $0x5a0] sm:$0xff]
    %v477 = vld [vmem:[#allocation5 + $0x5a8] sm:$0xff]
    %v478 = vld [vmem:[#allocation5 + $0x5b0] sm:$0xff]
    %v479 = vld [vmem:[#allocation5 + $0x5b8] sm:$0xff]
    %v480 = vld [vmem:[#allocation5 + $0x5c0] sm:$0xff]
    %v481 = vld [vmem:[#allocation5 + $0x5c8] sm:$0xff]
    %v482 = vld [vmem:[#allocation5 + $0x5d0] sm:$0xff]
    %v483 = vld [vmem:[#allocation5 + $0x5d8] sm:$0xff]
    %v484 = vld [vmem:[#allocation5 + $0x5e0] sm:$0xff]
    %v485 = vld [vmem:[#allocation5 + $0x5e8] sm:$0xff]
    %v486 = vld [vmem:[#allocation5 + $0x5f0] sm:$0xff]
    %v487 = vld [vmem:[#allocation5 + $0x5f8] sm:$0xff]
    %v488 = vld [vmem:[#allocation5 + $0x600] sm:$0xff]
    %v489 = vld [vmem:[#allocation5 + $0x608] sm:$0xff]
    %v490 = vld [vmem:[#allocation5 + $0x610] sm:$0xff]
    %v491 = vld [vmem:[#allocation5 + $0x618] sm:$0xff]
    %v492 = vld [vmem:[#allocation5 + $0x620] sm:$0xff]
    %v493 = vld [vmem:[#allocation5 + $0x628] sm:$0xff]
    %v494 = vld [vmem:[#allocation5 + $0x630] sm:$0xff]
    %v495 = vld [vmem:[#allocation5 + $0x638] sm:$0xff]
    %v496 = vld [vmem:[#allocation5 + $0x640] sm:$0xff]
    %v497 = vld [vmem:[#allocation5 + $0x648] sm:$0xff]
    %v498 = vld [vmem:[#allocation5 + $0x650] sm:$0xff]
    %v499 = vld [vmem:[#allocation5 + $0x658] sm:$0xff]
    %v500 = vld [vmem:[#allocation5 + $0x660] sm:$0xff]
    %v501 = vld [vmem:[#allocation5 + $0x668] sm:$0xff]
    %v502 = vld [vmem:[#allocation5 + $0x670] sm:$0xff]
    %v503 = vld [vmem:[#allocation5 + $0x678] sm:$0xff]
    %v504 = vld [vmem:[#allocation5 + $0x680] sm:$0xff]
    %v505 = vld [vmem:[#allocation5 + $0x688] sm:$0xff]
    %v506 = vld [vmem:[#allocation5 + $0x690] sm:$0xff]
    %v507 = vld [vmem:[#allocation5 + $0x698] sm:$0xff]
    %v508 = vld [vmem:[#allocation5 + $0x6a0] sm:$0xff]
    %v509 = vld [vmem:[#allocation5 + $0x6a8] sm:$0xff]
    %v510 = vld [vmem:[#allocation5 + $0x6b0] sm:$0xff]
    %v511 = vld [vmem:[#allocation5 + $0x6b8] sm:$0xff]
    %v512 = vld [vmem:[#allocation5 + $0x6c0] sm:$0xff]
    %v513 = vld [vmem:[#allocation5 + $0x6c8] sm:$0xff]
    %v514 = vld [vmem:[#allocation5 + $0x6d0] sm:$0xff]
    %v515 = vld [vmem:[#allocation5 + $0x6d8] sm:$0xff]
    %v516 = vld [vmem:[#allocation5 + $0x6e0] sm:$0xff]
    %v517 = vld [vmem:[#allocation5 + $0x6e8] sm:$0xff]
    %v518 = vld [vmem:[#allocation5 + $0x6f0] sm:$0xff]
    %v519 = vld [vmem:[#allocation5 + $0x6f8] sm:$0xff]
    %v520 = vld [vmem:[#allocation5 + $0x700] sm:$0xff]
    %v521 = vld [vmem:[#allocation5 + $0x708] sm:$0xff]
    %v522 = vld [vmem:[#allocation5 + $0x710] sm:$0xff]
    %v523 = vld [vmem:[#allocation5 + $0x718] sm:$0xff]
    %v524 = vld [vmem:[#allocation5 + $0x720] sm:$0xff]
    %v525 = vld [vmem:[#allocation5 + $0x728] sm:$0xff]
    %v526 = vld [vmem:[#allocation5 + $0x730] sm:$0xff]
    %v527 = vld [vmem:[#allocation5 + $0x738] sm:$0xff]
    %v528 = vld [vmem:[#allocation5 + $0x740] sm:$0xff]
    %v529 = vld [vmem:[#allocation5 + $0x748] sm:$0xff]
    %v530 = vld [vmem:[#allocation5 + $0x750] sm:$0xff]
    %v531 = vld [vmem:[#allocation5 + $0x758] sm:$0xff]
    %v532 = vld [vmem:[#allocation5 + $0x760] sm:$0xff]
    %v533 = vld [vmem:[#allocation5 + $0x768] sm:$0xff]
    %v534 = vld [vmem:[#allocation5 + $0x770] sm:$0xff]
    %v535 = vld [vmem:[#allocation5 + $0x778] sm:$0xff]
    %v536 = vld [vmem:[#allocation5 + $0x780] sm:$0xff]
    %v537 = vld [vmem:[#allocation5 + $0x788] sm:$0xff]
    %v538 = vld [vmem:[#allocation5 + $0x790] sm:$0xff]
    %v539 = vld [vmem:[#allocation5 + $0x798] sm:$0xff]
    %v540 = vld [vmem:[#allocation5 + $0x7a0] sm:$0xff]
    %v541 = vld [vmem:[#allocation5 + $0x7a8] sm:$0xff]
    %v542 = vld [vmem:[#allocation5 + $0x7b0] sm:$0xff]
    %v543 = vld [vmem:[#allocation5 + $0x7b8] sm:$0xff]
    %v544 = vld [vmem:[#allocation5 + $0x7c0] sm:$0xff]
    %v545 = vld [vmem:[#allocation5 + $0x7c8] sm:$0xff]
    %v546 = vld [vmem:[#allocation5 + $0x7d0] sm:$0xff]
    %v547 = vld [vmem:[#allocation5 + $0x7d8] sm:$0xff]
    %v548 = vld [vmem:[#allocation5 + $0x7e0] sm:$0xff]
    %v549 = vld [vmem:[#allocation5 + $0x7e8] sm:$0xff]
    %v550 = vld [vmem:[#allocation5 + $0x7f0] sm:$0xff]
    %v551 = vld [vmem:[#allocation5 + $0x7f8] sm:$0xff]
    %v552 = vld [vmem:[%s4] sm:$0xf]
    %v554 = vperm.slane %v552, 0
    %v555 = vperm.slane %v552, 1
    %v556 = vperm.slane %v552, 2
    %v557 = vperm.slane %v552, 3
    %v818 = vunpack.c.l.b16 %v296
    %v819 = vunpack.c.h.b16 %v296
    %v820 = vunpack.c.l.b16 %v297
    %v821 = vunpack.c.h.b16 %v297
    %v822 = vunpack.c.l.b16 %v298
    %v823 = vunpack.c.h.b16 %v298
    %v824 = vunpack.c.l.b16 %v299
    %v825 = vunpack.c.h.b16 %v299
    %v826 = vunpack.c.l.b16 %v300
    %v827 = vunpack.c.h.b16 %v300
    %v828 = vunpack.c.l.b16 %v301
    %v829 = vunpack.c.h.b16 %v301
    %v830 = vunpack.c.l.b16 %v302
    %v831 = vunpack.c.h.b16 %v302
    %v832 = vunpack.c.l.b16 %v303
    %v833 = vunpack.c.h.b16 %v303
    %v834 = vunpack.c.l.b16 %v304
    %v835 = vunpack.c.h.b16 %v304
    %v836 = vunpack.c.l.b16 %v305
    %v837 = vunpack.c.h.b16 %v305
    %v838 = vunpack.c.l.b16 %v306
    %v839 = vunpack.c.h.b16 %v306
    %v840 = vunpack.c.l.b16 %v307
    %v841 = vunpack.c.h.b16 %v307
    %v842 = vunpack.c.l.b16 %v308
    %v843 = vunpack.c.h.b16 %v308
    %v844 = vunpack.c.l.b16 %v309
    %v845 = vunpack.c.h.b16 %v309
    %v846 = vunpack.c.l.b16 %v310
    %v847 = vunpack.c.h.b16 %v310
    %v848 = vunpack.c.l.b16 %v311
    %v849 = vunpack.c.h.b16 %v311
    %v850 = vunpack.c.l.b16 %v312
    %v851 = vunpack.c.h.b16 %v312
    %v852 = vunpack.c.l.b16 %v313
    %v853 = vunpack.c.h.b16 %v313
    %v854 = vunpack.c.l.b16 %v314
    %v855 = vunpack.c.h.b16 %v314
    %v856 = vunpack.c.l.b16 %v315
    %v857 = vunpack.c.h.b16 %v315
    %v858 = vunpack.c.l.b16 %v316
    %v859 = vunpack.c.h.b16 %v316
    %v860 = vunpack.c.l.b16 %v317
    %v861 = vunpack.c.h.b16 %v317
    %v862 = vunpack.c.l.b16 %v318
    %v863 = vunpack.c.h.b16 %v318
    %v864 = vunpack.c.l.b16 %v319
    %v865 = vunpack.c.h.b16 %v319
    %v866 = vunpack.c.l.b16 %v320
    %v867 = vunpack.c.h.b16 %v320
    %v868 = vunpack.c.l.b16 %v321
    %v869 = vunpack.c.h.b16 %v321
    %v870 = vunpack.c.l.b16 %v322
    %v871 = vunpack.c.h.b16 %v322
    %v872 = vunpack.c.l.b16 %v323
    %v873 = vunpack.c.h.b16 %v323
    %v874 = vunpack.c.l.b16 %v324
    %v875 = vunpack.c.h.b16 %v324
    %v876 = vunpack.c.l.b16 %v325
    %v877 = vunpack.c.h.b16 %v325
    %v878 = vunpack.c.l.b16 %v326
    %v879 = vunpack.c.h.b16 %v326
    %v880 = vunpack.c.l.b16 %v327
    %v881 = vunpack.c.h.b16 %v327
    %v882 = vunpack.c.l.b16 %v328
    %v883 = vunpack.c.h.b16 %v328
    %v884 = vunpack.c.l.b16 %v329
    %v885 = vunpack.c.h.b16 %v329
    %v886 = vunpack.c.l.b16 %v330
    %v887 = vunpack.c.h.b16 %v330
    %v888 = vunpack.c.l.b16 %v331
    %v889 = vunpack.c.h.b16 %v331
    %v890 = vunpack.c.l.b16 %v332
    %v891 = vunpack.c.h.b16 %v332
    %v892 = vunpack.c.l.b16 %v333
    %v893 = vunpack.c.h.b16 %v333
    %v894 = vunpack.c.l.b16 %v334
    %v895 = vunpack.c.h.b16 %v334
    %v896 = vunpack.c.l.b16 %v335
    %v897 = vunpack.c.h.b16 %v335
    %v898 = vunpack.c.l.b16 %v336
    %v899 = vunpack.c.h.b16 %v336
    %v900 = vunpack.c.l.b16 %v337
    %v901 = vunpack.c.h.b16 %v337
    %v902 = vunpack.c.l.b16 %v338
    %v903 = vunpack.c.h.b16 %v338
    %v904 = vunpack.c.l.b16 %v339
    %v905 = vunpack.c.h.b16 %v339
    %v906 = vunpack.c.l.b16 %v340
    %v907 = vunpack.c.h.b16 %v340
    %v908 = vunpack.c.l.b16 %v341
    %v909 = vunpack.c.h.b16 %v341
    %v910 = vunpack.c.l.b16 %v342
    %v911 = vunpack.c.h.b16 %v342
    %v912 = vunpack.c.l.b16 %v343
    %v913 = vunpack.c.h.b16 %v343
    %v914 = vunpack.c.l.b16 %v344
    %v915 = vunpack.c.h.b16 %v344
    %v916 = vunpack.c.l.b16 %v345
    %v917 = vunpack.c.h.b16 %v345
    %v918 = vunpack.c.l.b16 %v346
    %v919 = vunpack.c.h.b16 %v346
    %v920 = vunpack.c.l.b16 %v347
    %v921 = vunpack.c.h.b16 %v347
    %v922 = vunpack.c.l.b16 %v348
    %v923 = vunpack.c.h.b16 %v348
    %v924 = vunpack.c.l.b16 %v349
    %v925 = vunpack.c.h.b16 %v349
    %v926 = vunpack.c.l.b16 %v350
    %v927 = vunpack.c.h.b16 %v350
    %v928 = vunpack.c.l.b16 %v351
    %v929 = vunpack.c.h.b16 %v351
    %v930 = vunpack.c.l.b16 %v352
    %v931 = vunpack.c.h.b16 %v352
    %v932 = vunpack.c.l.b16 %v353
    %v933 = vunpack.c.h.b16 %v353
    %v934 = vunpack.c.l.b16 %v354
    %v935 = vunpack.c.h.b16 %v354
    %v936 = vunpack.c.l.b16 %v355
    %v937 = vunpack.c.h.b16 %v355
    %v938 = vunpack.c.l.b16 %v356
    %v939 = vunpack.c.h.b16 %v356
    %v940 = vunpack.c.l.b16 %v357
    %v941 = vunpack.c.h.b16 %v357
    %v942 = vunpack.c.l.b16 %v358
    %v943 = vunpack.c.h.b16 %v358
    %v944 = vunpack.c.l.b16 %v359
    %v945 = vunpack.c.h.b16 %v359
    %v946 = vunpack.c.l.b16 %v360
    %v947 = vunpack.c.h.b16 %v360
    %v948 = vunpack.c.l.b16 %v361
    %v949 = vunpack.c.h.b16 %v361
    %v950 = vunpack.c.l.b16 %v362
    %v951 = vunpack.c.h.b16 %v362
    %v952 = vunpack.c.l.b16 %v363
    %v953 = vunpack.c.h.b16 %v363
    %v954 = vunpack.c.l.b16 %v364
    %v955 = vunpack.c.h.b16 %v364
    %v956 = vunpack.c.l.b16 %v365
    %v957 = vunpack.c.h.b16 %v365
    %v958 = vunpack.c.l.b16 %v366
    %v959 = vunpack.c.h.b16 %v366
    %v960 = vunpack.c.l.b16 %v367
    %v961 = vunpack.c.h.b16 %v367
    %v962 = vunpack.c.l.b16 %v368
    %v963 = vunpack.c.h.b16 %v368
    %v964 = vunpack.c.l.b16 %v369
    %v965 = vunpack.c.h.b16 %v369
    %v966 = vunpack.c.l.b16 %v370
    %v967 = vunpack.c.h.b16 %v370
    %v968 = vunpack.c.l.b16 %v371
    %v969 = vunpack.c.h.b16 %v371
    %v970 = vunpack.c.l.b16 %v372
    %v971 = vunpack.c.h.b16 %v372
    %v972 = vunpack.c.l.b16 %v373
    %v973 = vunpack.c.h.b16 %v373
    %v974 = vunpack.c.l.b16 %v374
    %v975 = vunpack.c.h.b16 %v374
    %v976 = vunpack.c.l.b16 %v375
    %v977 = vunpack.c.h.b16 %v375
    %v978 = vunpack.c.l.b16 %v376
    %v979 = vunpack.c.h.b16 %v376
    %v980 = vunpack.c.l.b16 %v377
    %v981 = vunpack.c.h.b16 %v377
    %v982 = vunpack.c.l.b16 %v378
    %v983 = vunpack.c.h.b16 %v378
    %v984 = vunpack.c.l.b16 %v379
    %v985 = vunpack.c.h.b16 %v379
    %v986 = vunpack.c.l.b16 %v380
    %v987 = vunpack.c.h.b16 %v380
    %v988 = vunpack.c.l.b16 %v381
    %v989 = vunpack.c.h.b16 %v381
    %v990 = vunpack.c.l.b16 %v382
    %v991 = vunpack.c.h.b16 %v382
    %v992 = vunpack.c.l.b16 %v383
    %v993 = vunpack.c.h.b16 %v383
    %v994 = vunpack.c.l.b16 %v384
    %v995 = vunpack.c.h.b16 %v384
    %v996 = vunpack.c.l.b16 %v385
    %v997 = vunpack.c.h.b16 %v385
    %v998 = vunpack.c.l.b16 %v386
    %v999 = vunpack.c.h.b16 %v386
    %v1000 = vunpack.c.l.b16 %v387
    %v1001 = vunpack.c.h.b16 %v387
    %v1002 = vunpack.c.l.b16 %v388
    %v1003 = vunpack.c.h.b16 %v388
    %v1004 = vunpack.c.l.b16 %v389
    %v1005 = vunpack.c.h.b16 %v389
    %v1006 = vunpack.c.l.b16 %v390
    %v1007 = vunpack.c.h.b16 %v390
    %v1008 = vunpack.c.l.b16 %v391
    %v1009 = vunpack.c.h.b16 %v391
    %v1010 = vunpack.c.l.b16 %v392
    %v1011 = vunpack.c.h.b16 %v392
    %v1012 = vunpack.c.l.b16 %v393
    %v1013 = vunpack.c.h.b16 %v393
    %v1014 = vunpack.c.l.b16 %v394
    %v1015 = vunpack.c.h.b16 %v394
    %v1016 = vunpack.c.l.b16 %v395
    %v1017 = vunpack.c.h.b16 %v395
    %v1018 = vunpack.c.l.b16 %v396
    %v1019 = vunpack.c.h.b16 %v396
    %v1020 = vunpack.c.l.b16 %v397
    %v1021 = vunpack.c.h.b16 %v397
    %v1022 = vunpack.c.l.b16 %v398
    %v1023 = vunpack.c.h.b16 %v398
    %v1024 = vunpack.c.l.b16 %v399
    %v1025 = vunpack.c.h.b16 %v399
    %v1026 = vunpack.c.l.b16 %v400
    %v1027 = vunpack.c.h.b16 %v400
    %v1028 = vunpack.c.l.b16 %v401
    %v1029 = vunpack.c.h.b16 %v401
    %v1030 = vunpack.c.l.b16 %v402
    %v1031 = vunpack.c.h.b16 %v402
    %v1032 = vunpack.c.l.b16 %v403
    %v1033 = vunpack.c.h.b16 %v403
    %v1034 = vunpack.c.l.b16 %v404
    %v1035 = vunpack.c.h.b16 %v404
    %v1036 = vunpack.c.l.b16 %v405
    %v1037 = vunpack.c.h.b16 %v405
    %v1038 = vunpack.c.l.b16 %v406
    %v1039 = vunpack.c.h.b16 %v406
    %v1040 = vunpack.c.l.b16 %v407
    %v1041 = vunpack.c.h.b16 %v407
    %v1042 = vunpack.c.l.b16 %v408
    %v1043 = vunpack.c.h.b16 %v408
    %v1044 = vunpack.c.l.b16 %v409
    %v1045 = vunpack.c.h.b16 %v409
    %v1046 = vunpack.c.l.b16 %v410
    %v1047 = vunpack.c.h.b16 %v410
    %v1048 = vunpack.c.l.b16 %v411
    %v1049 = vunpack.c.h.b16 %v411
    %v1050 = vunpack.c.l.b16 %v412
    %v1051 = vunpack.c.h.b16 %v412
    %v1052 = vunpack.c.l.b16 %v413
    %v1053 = vunpack.c.h.b16 %v413
    %v1054 = vunpack.c.l.b16 %v414
    %v1055 = vunpack.c.h.b16 %v414
    %v1056 = vunpack.c.l.b16 %v415
    %v1057 = vunpack.c.h.b16 %v415
    %v1058 = vunpack.c.l.b16 %v416
    %v1059 = vunpack.c.h.b16 %v416
    %v1060 = vunpack.c.l.b16 %v417
    %v1061 = vunpack.c.h.b16 %v417
    %v1062 = vunpack.c.l.b16 %v418
    %v1063 = vunpack.c.h.b16 %v418
    %v1064 = vunpack.c.l.b16 %v419
    %v1065 = vunpack.c.h.b16 %v419
    %v1066 = vunpack.c.l.b16 %v420
    %v1067 = vunpack.c.h.b16 %v420
    %v1068 = vunpack.c.l.b16 %v421
    %v1069 = vunpack.c.h.b16 %v421
    %v1070 = vunpack.c.l.b16 %v422
    %v1071 = vunpack.c.h.b16 %v422
    %v1072 = vunpack.c.l.b16 %v423
    %v1073 = vunpack.c.h.b16 %v423
    %v1074 = vunpack.c.l.b16 %v424
    %v1075 = vunpack.c.h.b16 %v424
    %v1076 = vunpack.c.l.b16 %v425
    %v1077 = vunpack.c.h.b16 %v425
    %v1078 = vunpack.c.l.b16 %v426
    %v1079 = vunpack.c.h.b16 %v426
    %v1080 = vunpack.c.l.b16 %v427
    %v1081 = vunpack.c.h.b16 %v427
    %v1082 = vunpack.c.l.b16 %v428
    %v1083 = vunpack.c.h.b16 %v428
    %v1084 = vunpack.c.l.b16 %v429
    %v1085 = vunpack.c.h.b16 %v429
    %v1086 = vunpack.c.l.b16 %v430
    %v1087 = vunpack.c.h.b16 %v430
    %v1088 = vunpack.c.l.b16 %v431
    %v1089 = vunpack.c.h.b16 %v431
    %v1090 = vunpack.c.l.b16 %v432
    %v1091 = vunpack.c.h.b16 %v432
    %v1092 = vunpack.c.l.b16 %v433
    %v1093 = vunpack.c.h.b16 %v433
    %v1094 = vunpack.c.l.b16 %v434
    %v1095 = vunpack.c.h.b16 %v434
    %v1096 = vunpack.c.l.b16 %v435
    %v1097 = vunpack.c.h.b16 %v435
    %v1098 = vunpack.c.l.b16 %v436
    %v1099 = vunpack.c.h.b16 %v436
    %v1100 = vunpack.c.l.b16 %v437
    %v1101 = vunpack.c.h.b16 %v437
    %v1102 = vunpack.c.l.b16 %v438
    %v1103 = vunpack.c.h.b16 %v438
    %v1104 = vunpack.c.l.b16 %v439
    %v1105 = vunpack.c.h.b16 %v439
    %v1106 = vunpack.c.l.b16 %v440
    %v1107 = vunpack.c.h.b16 %v440
    %v1108 = vunpack.c.l.b16 %v441
    %v1109 = vunpack.c.h.b16 %v441
    %v1110 = vunpack.c.l.b16 %v442
    %v1111 = vunpack.c.h.b16 %v442
    %v1112 = vunpack.c.l.b16 %v443
    %v1113 = vunpack.c.h.b16 %v443
    %v1114 = vunpack.c.l.b16 %v444
    %v1115 = vunpack.c.h.b16 %v444
    %v1116 = vunpack.c.l.b16 %v445
    %v1117 = vunpack.c.h.b16 %v445
    %v1118 = vunpack.c.l.b16 %v446
    %v1119 = vunpack.c.h.b16 %v446
    %v1120 = vunpack.c.l.b16 %v447
    %v1121 = vunpack.c.h.b16 %v447
    %v1122 = vunpack.c.l.b16 %v448
    %v1123 = vunpack.c.h.b16 %v448
    %v1124 = vunpack.c.l.b16 %v449
    %v1125 = vunpack.c.h.b16 %v449
    %v1126 = vunpack.c.l.b16 %v450
    %v1127 = vunpack.c.h.b16 %v450
    %v1128 = vunpack.c.l.b16 %v451
    %v1129 = vunpack.c.h.b16 %v451
    %v1130 = vunpack.c.l.b16 %v452
    %v1131 = vunpack.c.h.b16 %v452
    %v1132 = vunpack.c.l.b16 %v453
    %v1133 = vunpack.c.h.b16 %v453
    %v1134 = vunpack.c.l.b16 %v454
    %v1135 = vunpack.c.h.b16 %v454
    %v1136 = vunpack.c.l.b16 %v455
    %v1137 = vunpack.c.h.b16 %v455
    %v1138 = vunpack.c.l.b16 %v456
    %v1139 = vunpack.c.h.b16 %v456
    %v1140 = vunpack.c.l.b16 %v457
    %v1141 = vunpack.c.h.b16 %v457
    %v1142 = vunpack.c.l.b16 %v458
    %v1143 = vunpack.c.h.b16 %v458
    %v1144 = vunpack.c.l.b16 %v459
    %v1145 = vunpack.c.h.b16 %v459
    %v1146 = vunpack.c.l.b16 %v460
    %v1147 = vunpack.c.h.b16 %v460
    %v1148 = vunpack.c.l.b16 %v461
    %v1149 = vunpack.c.h.b16 %v461
    %v1150 = vunpack.c.l.b16 %v462
    %v1151 = vunpack.c.h.b16 %v462
    %v1152 = vunpack.c.l.b16 %v463
    %v1153 = vunpack.c.h.b16 %v463
    %v1154 = vunpack.c.l.b16 %v464
    %v1155 = vunpack.c.h.b16 %v464
    %v1156 = vunpack.c.l.b16 %v465
    %v1157 = vunpack.c.h.b16 %v465
    %v1158 = vunpack.c.l.b16 %v466
    %v1159 = vunpack.c.h.b16 %v466
    %v1160 = vunpack.c.l.b16 %v467
    %v1161 = vunpack.c.h.b16 %v467
    %v1162 = vunpack.c.l.b16 %v468
    %v1163 = vunpack.c.h.b16 %v468
    %v1164 = vunpack.c.l.b16 %v469
    %v1165 = vunpack.c.h.b16 %v469
    %v1166 = vunpack.c.l.b16 %v470
    %v1167 = vunpack.c.h.b16 %v470
    %v1168 = vunpack.c.l.b16 %v471
    %v1169 = vunpack.c.h.b16 %v471
    %v1170 = vunpack.c.l.b16 %v472
    %v1171 = vunpack.c.h.b16 %v472
    %v1172 = vunpack.c.l.b16 %v473
    %v1173 = vunpack.c.h.b16 %v473
    %v1174 = vunpack.c.l.b16 %v474
    %v1175 = vunpack.c.h.b16 %v474
    %v1176 = vunpack.c.l.b16 %v475
    %v1177 = vunpack.c.h.b16 %v475
    %v1178 = vunpack.c.l.b16 %v476
    %v1179 = vunpack.c.h.b16 %v476
    %v1180 = vunpack.c.l.b16 %v477
    %v1181 = vunpack.c.h.b16 %v477
    %v1182 = vunpack.c.l.b16 %v478
    %v1183 = vunpack.c.h.b16 %v478
    %v1184 = vunpack.c.l.b16 %v479
    %v1185 = vunpack.c.h.b16 %v479
    %v1186 = vunpack.c.l.b16 %v480
    %v1187 = vunpack.c.h.b16 %v480
    %v1188 = vunpack.c.l.b16 %v481
    %v1189 = vunpack.c.h.b16 %v481
    %v1190 = vunpack.c.l.b16 %v482
    %v1191 = vunpack.c.h.b16 %v482
    %v1192 = vunpack.c.l.b16 %v483
    %v1193 = vunpack.c.h.b16 %v483
    %v1194 = vunpack.c.l.b16 %v484
    %v1195 = vunpack.c.h.b16 %v484
    %v1196 = vunpack.c.l.b16 %v485
    %v1197 = vunpack.c.h.b16 %v485
    %v1198 = vunpack.c.l.b16 %v486
    %v1199 = vunpack.c.h.b16 %v486
    %v1200 = vunpack.c.l.b16 %v487
    %v1201 = vunpack.c.h.b16 %v487
    %v1202 = vunpack.c.l.b16 %v488
    %v1203 = vunpack.c.h.b16 %v488
    %v1204 = vunpack.c.l.b16 %v489
    %v1205 = vunpack.c.h.b16 %v489
    %v1206 = vunpack.c.l.b16 %v490
    %v1207 = vunpack.c.h.b16 %v490
    %v1208 = vunpack.c.l.b16 %v491
    %v1209 = vunpack.c.h.b16 %v491
    %v1210 = vunpack.c.l.b16 %v492
    %v1211 = vunpack.c.h.b16 %v492
    %v1212 = vunpack.c.l.b16 %v493
    %v1213 = vunpack.c.h.b16 %v493
    %v1214 = vunpack.c.l.b16 %v494
    %v1215 = vunpack.c.h.b16 %v494
    %v1216 = vunpack.c.l.b16 %v495
    %v1217 = vunpack.c.h.b16 %v495
    %v1218 = vunpack.c.l.b16 %v496
    %v1219 = vunpack.c.h.b16 %v496
    %v1220 = vunpack.c.l.b16 %v497
    %v1221 = vunpack.c.h.b16 %v497
    %v1222 = vunpack.c.l.b16 %v498
    %v1223 = vunpack.c.h.b16 %v498
    %v1224 = vunpack.c.l.b16 %v499
    %v1225 = vunpack.c.h.b16 %v499
    %v1226 = vunpack.c.l.b16 %v500
    %v1227 = vunpack.c.h.b16 %v500
    %v1228 = vunpack.c.l.b16 %v501
    %v1229 = vunpack.c.h.b16 %v501
    %v1230 = vunpack.c.l.b16 %v502
    %v1231 = vunpack.c.h.b16 %v502
    %v1232 = vunpack.c.l.b16 %v503
    %v1233 = vunpack.c.h.b16 %v503
    %v1234 = vunpack.c.l.b16 %v504
    %v1235 = vunpack.c.h.b16 %v504
    %v1236 = vunpack.c.l.b16 %v505
    %v1237 = vunpack.c.h.b16 %v505
    %v1238 = vunpack.c.l.b16 %v506
    %v1239 = vunpack.c.h.b16 %v506
    %v1240 = vunpack.c.l.b16 %v507
    %v1241 = vunpack.c.h.b16 %v507
    %v1242 = vunpack.c.l.b16 %v508
    %v1243 = vunpack.c.h.b16 %v508
    %v1244 = vunpack.c.l.b16 %v509
    %v1245 = vunpack.c.h.b16 %v509
    %v1246 = vunpack.c.l.b16 %v510
    %v1247 = vunpack.c.h.b16 %v510
    %v1248 = vunpack.c.l.b16 %v511
    %v1249 = vunpack.c.h.b16 %v511
    %v1250 = vunpack.c.l.b16 %v512
    %v1251 = vunpack.c.h.b16 %v512
    %v1252 = vunpack.c.l.b16 %v513
    %v1253 = vunpack.c.h.b16 %v513
    %v1254 = vunpack.c.l.b16 %v514
    %v1255 = vunpack.c.h.b16 %v514
    %v1256 = vunpack.c.l.b16 %v515
    %v1257 = vunpack.c.h.b16 %v515
    %v1258 = vunpack.c.l.b16 %v516
    %v1259 = vunpack.c.h.b16 %v516
    %v1260 = vunpack.c.l.b16 %v517
    %v1261 = vunpack.c.h.b16 %v517
    %v1262 = vunpack.c.l.b16 %v518
    %v1263 = vunpack.c.h.b16 %v518
    %v1264 = vunpack.c.l.b16 %v519
    %v1265 = vunpack.c.h.b16 %v519
    %v1266 = vunpack.c.l.b16 %v520
    %v1267 = vunpack.c.h.b16 %v520
    %v1268 = vunpack.c.l.b16 %v521
    %v1269 = vunpack.c.h.b16 %v521
    %v1270 = vunpack.c.l.b16 %v522
    %v1271 = vunpack.c.h.b16 %v522
    %v1272 = vunpack.c.l.b16 %v523
    %v1273 = vunpack.c.h.b16 %v523
    %v1274 = vunpack.c.l.b16 %v524
    %v1275 = vunpack.c.h.b16 %v524
    %v1276 = vunpack.c.l.b16 %v525
    %v1277 = vunpack.c.h.b16 %v525
    %v1278 = vunpack.c.l.b16 %v526
    %v1279 = vunpack.c.h.b16 %v526
    %v1280 = vunpack.c.l.b16 %v527
    %v1281 = vunpack.c.h.b16 %v527
    %v1282 = vunpack.c.l.b16 %v528
    %v1283 = vunpack.c.h.b16 %v528
    %v1284 = vunpack.c.l.b16 %v529
    %v1285 = vunpack.c.h.b16 %v529
    %v1286 = vunpack.c.l.b16 %v530
    %v1287 = vunpack.c.h.b16 %v530
    %v1288 = vunpack.c.l.b16 %v531
    %v1289 = vunpack.c.h.b16 %v531
    %v1290 = vunpack.c.l.b16 %v532
    %v1291 = vunpack.c.h.b16 %v532
    %v1292 = vunpack.c.l.b16 %v533
    %v1293 = vunpack.c.h.b16 %v533
    %v1294 = vunpack.c.l.b16 %v534
    %v1295 = vunpack.c.h.b16 %v534
    %v1296 = vunpack.c.l.b16 %v535
    %v1297 = vunpack.c.h.b16 %v535
    %v1298 = vunpack.c.l.b16 %v536
    %v1299 = vunpack.c.h.b16 %v536
    %v1300 = vunpack.c.l.b16 %v537
    %v1301 = vunpack.c.h.b16 %v537
    %v1302 = vunpack.c.l.b16 %v538
    %v1303 = vunpack.c.h.b16 %v538
    %v1304 = vunpack.c.l.b16 %v539
    %v1305 = vunpack.c.h.b16 %v539
    %v1306 = vunpack.c.l.b16 %v540
    %v1307 = vunpack.c.h.b16 %v540
    %v1308 = vunpack.c.l.b16 %v541
    %v1309 = vunpack.c.h.b16 %v541
    %v1310 = vunpack.c.l.b16 %v542
    %v1311 = vunpack.c.h.b16 %v542
    %v1312 = vunpack.c.l.b16 %v543
    %v1313 = vunpack.c.h.b16 %v543
    %v1314 = vunpack.c.l.b16 %v544
    %v1315 = vunpack.c.h.b16 %v544
    %v1316 = vunpack.c.l.b16 %v545
    %v1317 = vunpack.c.h.b16 %v545
    %v1318 = vunpack.c.l.b16 %v546
    %v1319 = vunpack.c.h.b16 %v546
    %v1320 = vunpack.c.l.b16 %v547
    %v1321 = vunpack.c.h.b16 %v547
    %v1322 = vunpack.c.l.b16 %v548
    %v1323 = vunpack.c.h.b16 %v548
    %v1324 = vunpack.c.l.b16 %v549
    %v1325 = vunpack.c.h.b16 %v549
    %v1326 = vunpack.c.l.b16 %v550
    %v1327 = vunpack.c.h.b16 %v550
    %v1328 = vunpack.c.l.b16 %v551
    %v1329 = vunpack.c.h.b16 %v551
    %v1330 = vpack.c.b16 %v822, %v818
    %v1331 = vpack.c.b16 %v823, %v819
    %v1332 = vpack.c.b16 %v824, %v820
    %v1333 = vpack.c.b16 %v825, %v821
    %v1334 = vpack.c.b16 %v830, %v826
    %v1335 = vpack.c.b16 %v831, %v827
    %v1336 = vpack.c.b16 %v832, %v828
    %v1337 = vpack.c.b16 %v833, %v829
    %v1338 = vpack.c.b16 %v838, %v834
    %v1339 = vpack.c.b16 %v839, %v835
    %v1340 = vpack.c.b16 %v840, %v836
    %v1341 = vpack.c.b16 %v841, %v837
    %v1342 = vpack.c.b16 %v846, %v842
    %v1343 = vpack.c.b16 %v847, %v843
    %v1344 = vpack.c.b16 %v848, %v844
    %v1345 = vpack.c.b16 %v849, %v845
    %v1346 = vpack.c.b16 %v854, %v850
    %v1347 = vpack.c.b16 %v855, %v851
    %v1348 = vpack.c.b16 %v856, %v852
    %v1349 = vpack.c.b16 %v857, %v853
    %v1350 = vpack.c.b16 %v862, %v858
    %v1351 = vpack.c.b16 %v863, %v859
    %v1352 = vpack.c.b16 %v864, %v860
    %v1353 = vpack.c.b16 %v865, %v861
    %v1354 = vpack.c.b16 %v870, %v866
    %v1355 = vpack.c.b16 %v871, %v867
    %v1356 = vpack.c.b16 %v872, %v868
    %v1357 = vpack.c.b16 %v873, %v869
    %v1358 = vpack.c.b16 %v878, %v874
    %v1359 = vpack.c.b16 %v879, %v875
    %v1360 = vpack.c.b16 %v880, %v876
    %v1361 = vpack.c.b16 %v881, %v877
    %v1362 = vpack.c.b16 %v886, %v882
    %v1363 = vpack.c.b16 %v887, %v883
    %v1364 = vpack.c.b16 %v888, %v884
    %v1365 = vpack.c.b16 %v889, %v885
    %v1366 = vpack.c.b16 %v894, %v890
    %v1367 = vpack.c.b16 %v895, %v891
    %v1368 = vpack.c.b16 %v896, %v892
    %v1369 = vpack.c.b16 %v897, %v893
    %v1370 = vpack.c.b16 %v902, %v898
    %v1371 = vpack.c.b16 %v903, %v899
    %v1372 = vpack.c.b16 %v904, %v900
    %v1373 = vpack.c.b16 %v905, %v901
    %v1374 = vpack.c.b16 %v910, %v906
    %v1375 = vpack.c.b16 %v911, %v907
    %v1376 = vpack.c.b16 %v912, %v908
    %v1377 = vpack.c.b16 %v913, %v909
    %v1378 = vpack.c.b16 %v918, %v914
    %v1379 = vpack.c.b16 %v919, %v915
    %v1380 = vpack.c.b16 %v920, %v916
    %v1381 = vpack.c.b16 %v921, %v917
    %v1382 = vpack.c.b16 %v926, %v922
    %v1383 = vpack.c.b16 %v927, %v923
    %v1384 = vpack.c.b16 %v928, %v924
    %v1385 = vpack.c.b16 %v929, %v925
    %v1386 = vpack.c.b16 %v934, %v930
    %v1387 = vpack.c.b16 %v935, %v931
    %v1388 = vpack.c.b16 %v936, %v932
    %v1389 = vpack.c.b16 %v937, %v933
    %v1390 = vpack.c.b16 %v942, %v938
    %v1391 = vpack.c.b16 %v943, %v939
    %v1392 = vpack.c.b16 %v944, %v940
    %v1393 = vpack.c.b16 %v945, %v941
    %v1394 = vpack.c.b16 %v950, %v946
    %v1395 = vpack.c.b16 %v951, %v947
    %v1396 = vpack.c.b16 %v952, %v948
    %v1397 = vpack.c.b16 %v953, %v949
    %v1398 = vpack.c.b16 %v958, %v954
    %v1399 = vpack.c.b16 %v959, %v955
    %v1400 = vpack.c.b16 %v960, %v956
    %v1401 = vpack.c.b16 %v961, %v957
    %v1402 = vpack.c.b16 %v966, %v962
    %v1403 = vpack.c.b16 %v967, %v963
    %v1404 = vpack.c.b16 %v968, %v964
    %v1405 = vpack.c.b16 %v969, %v965
    %v1406 = vpack.c.b16 %v974, %v970
    %v1407 = vpack.c.b16 %v975, %v971
    %v1408 = vpack.c.b16 %v976, %v972
    %v1409 = vpack.c.b16 %v977, %v973
    %v1410 = vpack.c.b16 %v982, %v978
    %v1411 = vpack.c.b16 %v983, %v979
    %v1412 = vpack.c.b16 %v984, %v980
    %v1413 = vpack.c.b16 %v985, %v981
    %v1414 = vpack.c.b16 %v990, %v986
    %v1415 = vpack.c.b16 %v991, %v987
    %v1416 = vpack.c.b16 %v992, %v988
    %v1417 = vpack.c.b16 %v993, %v989
    %v1418 = vpack.c.b16 %v998, %v994
    %v1419 = vpack.c.b16 %v999, %v995
    %v1420 = vpack.c.b16 %v1000, %v996
    %v1421 = vpack.c.b16 %v1001, %v997
    %v1422 = vpack.c.b16 %v1006, %v1002
    %v1423 = vpack.c.b16 %v1007, %v1003
    %v1424 = vpack.c.b16 %v1008, %v1004
    %v1425 = vpack.c.b16 %v1009, %v1005
    %v1426 = vpack.c.b16 %v1014, %v1010
    %v1427 = vpack.c.b16 %v1015, %v1011
    %v1428 = vpack.c.b16 %v1016, %v1012
    %v1429 = vpack.c.b16 %v1017, %v1013
    %v1430 = vpack.c.b16 %v1022, %v1018
    %v1431 = vpack.c.b16 %v1023, %v1019
    %v1432 = vpack.c.b16 %v1024, %v1020
    %v1433 = vpack.c.b16 %v1025, %v1021
    %v1434 = vpack.c.b16 %v1030, %v1026
    %v1435 = vpack.c.b16 %v1031, %v1027
    %v1436 = vpack.c.b16 %v1032, %v1028
    %v1437 = vpack.c.b16 %v1033, %v1029
    %v1438 = vpack.c.b16 %v1038, %v1034
    %v1439 = vpack.c.b16 %v1039, %v1035
    %v1440 = vpack.c.b16 %v1040, %v1036
    %v1441 = vpack.c.b16 %v1041, %v1037
    %v1442 = vpack.c.b16 %v1046, %v1042
    %v1443 = vpack.c.b16 %v1047, %v1043
    %v1444 = vpack.c.b16 %v1048, %v1044
    %v1445 = vpack.c.b16 %v1049, %v1045
    %v1446 = vpack.c.b16 %v1054, %v1050
    %v1447 = vpack.c.b16 %v1055, %v1051
    %v1448 = vpack.c.b16 %v1056, %v1052
    %v1449 = vpack.c.b16 %v1057, %v1053
    %v1450 = vpack.c.b16 %v1062, %v1058
    %v1451 = vpack.c.b16 %v1063, %v1059
    %v1452 = vpack.c.b16 %v1064, %v1060
    %v1453 = vpack.c.b16 %v1065, %v1061
    %v1454 = vpack.c.b16 %v1070, %v1066
    %v1455 = vpack.c.b16 %v1071, %v1067
    %v1456 = vpack.c.b16 %v1072, %v1068
    %v1457 = vpack.c.b16 %v1073, %v1069
    %v1458 = vpack.c.b16 %v1078, %v1074
    %v1459 = vpack.c.b16 %v1079, %v1075
    %v1460 = vpack.c.b16 %v1080, %v1076
    %v1461 = vpack.c.b16 %v1081, %v1077
    %v1462 = vpack.c.b16 %v1086, %v1082
    %v1463 = vpack.c.b16 %v1087, %v1083
    %v1464 = vpack.c.b16 %v1088, %v1084
    %v1465 = vpack.c.b16 %v1089, %v1085
    %v1466 = vpack.c.b16 %v1094, %v1090
    %v1467 = vpack.c.b16 %v1095, %v1091
    %v1468 = vpack.c.b16 %v1096, %v1092
    %v1469 = vpack.c.b16 %v1097, %v1093
    %v1470 = vpack.c.b16 %v1102, %v1098
    %v1471 = vpack.c.b16 %v1103, %v1099
    %v1472 = vpack.c.b16 %v1104, %v1100
    %v1473 = vpack.c.b16 %v1105, %v1101
    %v1474 = vpack.c.b16 %v1110, %v1106
    %v1475 = vpack.c.b16 %v1111, %v1107
    %v1476 = vpack.c.b16 %v1112, %v1108
    %v1477 = vpack.c.b16 %v1113, %v1109
    %v1478 = vpack.c.b16 %v1118, %v1114
    %v1479 = vpack.c.b16 %v1119, %v1115
    %v1480 = vpack.c.b16 %v1120, %v1116
    %v1481 = vpack.c.b16 %v1121, %v1117
    %v1482 = vpack.c.b16 %v1126, %v1122
    %v1483 = vpack.c.b16 %v1127, %v1123
    %v1484 = vpack.c.b16 %v1128, %v1124
    %v1485 = vpack.c.b16 %v1129, %v1125
    %v1486 = vpack.c.b16 %v1134, %v1130
    %v1487 = vpack.c.b16 %v1135, %v1131
    %v1488 = vpack.c.b16 %v1136, %v1132
    %v1489 = vpack.c.b16 %v1137, %v1133
    %v1490 = vpack.c.b16 %v1142, %v1138
    %v1491 = vpack.c.b16 %v1143, %v1139
    %v1492 = vpack.c.b16 %v1144, %v1140
    %v1493 = vpack.c.b16 %v1145, %v1141
    %v1494 = vpack.c.b16 %v1150, %v1146
    %v1495 = vpack.c.b16 %v1151, %v1147
    %v1496 = vpack.c.b16 %v1152, %v1148
    %v1497 = vpack.c.b16 %v1153, %v1149
    %v1498 = vpack.c.b16 %v1158, %v1154
    %v1499 = vpack.c.b16 %v1159, %v1155
    %v1500 = vpack.c.b16 %v1160, %v1156
    %v1501 = vpack.c.b16 %v1161, %v1157
    %v1502 = vpack.c.b16 %v1166, %v1162
    %v1503 = vpack.c.b16 %v1167, %v1163
    %v1504 = vpack.c.b16 %v1168, %v1164
    %v1505 = vpack.c.b16 %v1169, %v1165
    %v1506 = vpack.c.b16 %v1174, %v1170
    %v1507 = vpack.c.b16 %v1175, %v1171
    %v1508 = vpack.c.b16 %v1176, %v1172
    %v1509 = vpack.c.b16 %v1177, %v1173
    %v1510 = vpack.c.b16 %v1182, %v1178
    %v1511 = vpack.c.b16 %v1183, %v1179
    %v1512 = vpack.c.b16 %v1184, %v1180
    %v1513 = vpack.c.b16 %v1185, %v1181
    %v1514 = vpack.c.b16 %v1190, %v1186
    %v1515 = vpack.c.b16 %v1191, %v1187
    %v1516 = vpack.c.b16 %v1192, %v1188
    %v1517 = vpack.c.b16 %v1193, %v1189
    %v1518 = vpack.c.b16 %v1198, %v1194
    %v1519 = vpack.c.b16 %v1199, %v1195
    %v1520 = vpack.c.b16 %v1200, %v1196
    %v1521 = vpack.c.b16 %v1201, %v1197
    %v1522 = vpack.c.b16 %v1206, %v1202
    %v1523 = vpack.c.b16 %v1207, %v1203
    %v1524 = vpack.c.b16 %v1208, %v1204
    %v1525 = vpack.c.b16 %v1209, %v1205
    %v1526 = vpack.c.b16 %v1214, %v1210
    %v1527 = vpack.c.b16 %v1215, %v1211
    %v1528 = vpack.c.b16 %v1216, %v1212
    %v1529 = vpack.c.b16 %v1217, %v1213
    %v1530 = vpack.c.b16 %v1222, %v1218
    %v1531 = vpack.c.b16 %v1223, %v1219
    %v1532 = vpack.c.b16 %v1224, %v1220
    %v1533 = vpack.c.b16 %v1225, %v1221
    %v1534 = vpack.c.b16 %v1230, %v1226
    %v1535 = vpack.c.b16 %v1231, %v1227
    %v1536 = vpack.c.b16 %v1232, %v1228
    %v1537 = vpack.c.b16 %v1233, %v1229
    %v1538 = vpack.c.b16 %v1238, %v1234
    %v1539 = vpack.c.b16 %v1239, %v1235
    %v1540 = vpack.c.b16 %v1240, %v1236
    %v1541 = vpack.c.b16 %v1241, %v1237
    %v1542 = vpack.c.b16 %v1246, %v1242
    %v1543 = vpack.c.b16 %v1247, %v1243
    %v1544 = vpack.c.b16 %v1248, %v1244
    %v1545 = vpack.c.b16 %v1249, %v1245
    %v1546 = vpack.c.b16 %v1254, %v1250
    %v1547 = vpack.c.b16 %v1255, %v1251
    %v1548 = vpack.c.b16 %v1256, %v1252
    %v1549 = vpack.c.b16 %v1257, %v1253
    %v1550 = vpack.c.b16 %v1262, %v1258
    %v1551 = vpack.c.b16 %v1263, %v1259
    %v1552 = vpack.c.b16 %v1264, %v1260
    %v1553 = vpack.c.b16 %v1265, %v1261
    %v1554 = vpack.c.b16 %v1270, %v1266
    %v1555 = vpack.c.b16 %v1271, %v1267
    %v1556 = vpack.c.b16 %v1272, %v1268
    %v1557 = vpack.c.b16 %v1273, %v1269
    %v1558 = vpack.c.b16 %v1278, %v1274
    %v1559 = vpack.c.b16 %v1279, %v1275
    %v1560 = vpack.c.b16 %v1280, %v1276
    %v1561 = vpack.c.b16 %v1281, %v1277
    %v1562 = vpack.c.b16 %v1286, %v1282
    %v1563 = vpack.c.b16 %v1287, %v1283
    %v1564 = vpack.c.b16 %v1288, %v1284
    %v1565 = vpack.c.b16 %v1289, %v1285
    %v1566 = vpack.c.b16 %v1294, %v1290
    %v1567 = vpack.c.b16 %v1295, %v1291
    %v1568 = vpack.c.b16 %v1296, %v1292
    %v1569 = vpack.c.b16 %v1297, %v1293
    %v1570 = vpack.c.b16 %v1302, %v1298
    %v1571 = vpack.c.b16 %v1303, %v1299
    %v1572 = vpack.c.b16 %v1304, %v1300
    %v1573 = vpack.c.b16 %v1305, %v1301
    %v1574 = vpack.c.b16 %v1310, %v1306
    %v1575 = vpack.c.b16 %v1311, %v1307
    %v1576 = vpack.c.b16 %v1312, %v1308
    %v1577 = vpack.c.b16 %v1313, %v1309
    %v1578 = vpack.c.b16 %v1318, %v1314
    %v1579 = vpack.c.b16 %v1319, %v1315
    %v1580 = vpack.c.b16 %v1320, %v1316
    %v1581 = vpack.c.b16 %v1321, %v1317
    %v1582 = vpack.c.b16 %v1326, %v1322
    %v1583 = vpack.c.b16 %v1327, %v1323
    %v1584 = vpack.c.b16 %v1328, %v1324
    %v1585 = vpack.c.b16 %v1329, %v1325
    %1842 = vmatpush.bf16.msra.mxu0 %v1358
    %1843 = vmatpush.bf16.msra.mxu0 %v1354
    %1844 = vmatpush.bf16.msra.mxu0 %v1350
    %1845 = vmatpush.bf16.msra.mxu0 %v1346
    %1846 = vmatpush.bf16.msra.mxu0 %v1342
    %1847 = vmatpush.bf16.msra.mxu0 %v1338
    %1848 = vmatpush.bf16.msra.mxu0 %v1334
    %1849 = vmatpush.bf16.msra.mxu0 %v1330
    %1850 = vmatmul.bf16.gmra.mxu0 %v288
    %v1851 = vpop.f32.mrf.mxu0
    %v1852 = vadd.f32 %v554, %v1851
    %v1853 = vpop.f32.mrf.mxu0
    %1854 = vdwg.mxu0
    %1855 = vmatpush.bf16.msra.mxu0 %v1390
    %1856 = vmatpush.bf16.msra.mxu0 %v1386
    %1857 = vmatpush.bf16.msra.mxu0 %v1382
    %1858 = vmatpush.bf16.msra.mxu0 %v1378
    %1859 = vmatpush.bf16.msra.mxu0 %v1374
    %1860 = vmatpush.bf16.msra.mxu0 %v1370
    %1861 = vmatpush.bf16.msra.mxu0 %v1366
    %1862 = vmatpush.bf16.msra.mxu0 %v1362
    %1863 = vmatmul.bf16.gmra.mxu0 %v289
    %v1864 = vpop.f32.mrf.mxu0
    %v1865 = vadd.f32 %v1852, %v1864
    %v1866 = vpop.f32.mrf.mxu0
    %1867 = vdwg.mxu0
    %1868 = vmatpush.bf16.msra.mxu0 %v1422
    %1869 = vmatpush.bf16.msra.mxu0 %v1418
    %1870 = vmatpush.bf16.msra.mxu0 %v1414
    %1871 = vmatpush.bf16.msra.mxu0 %v1410
    %1872 = vmatpush.bf16.msra.mxu0 %v1406
    %1873 = vmatpush.bf16.msra.mxu0 %v1402
    %1874 = vmatpush.bf16.msra.mxu0 %v1398
    %1875 = vmatpush.bf16.msra.mxu0 %v1394
    %1876 = vmatmul.bf16.gmra.mxu0 %v290
    %v1877 = vpop.f32.mrf.mxu0
    %v1878 = vadd.f32 %v1865, %v1877
    %v1879 = vpop.f32.mrf.mxu0
    %1880 = vdwg.mxu0
    %1881 = vmatpush.bf16.msra.mxu0 %v1454
    %1882 = vmatpush.bf16.msra.mxu0 %v1450
    %1883 = vmatpush.bf16.msra.mxu0 %v1446
    %1884 = vmatpush.bf16.msra.mxu0 %v1442
    %1885 = vmatpush.bf16.msra.mxu0 %v1438
    %1886 = vmatpush.bf16.msra.mxu0 %v1434
    %1887 = vmatpush.bf16.msra.mxu0 %v1430
    %1888 = vmatpush.bf16.msra.mxu0 %v1426
    %1889 = vmatmul.bf16.gmra.mxu0 %v291
    %v1890 = vpop.f32.mrf.mxu0
    %v1891 = vadd.f32 %v1878, %v1890
    %v1892 = vpop.f32.mrf.mxu0
    %1893 = vdwg.mxu0
    %1894 = vmatpush.bf16.msra.mxu0 %v1486
    %1895 = vmatpush.bf16.msra.mxu0 %v1482
    %1896 = vmatpush.bf16.msra.mxu0 %v1478
    %1897 = vmatpush.bf16.msra.mxu0 %v1474
    %1898 = vmatpush.bf16.msra.mxu0 %v1470
    %1899 = vmatpush.bf16.msra.mxu0 %v1466
    %1900 = vmatpush.bf16.msra.mxu0 %v1462
    %1901 = vmatpush.bf16.msra.mxu0 %v1458
    %1902 = vmatmul.bf16.gmra.mxu0 %v292
    %v1903 = vpop.f32.mrf.mxu0
    %v1904 = vadd.f32 %v1891, %v1903
    %v1905 = vpop.f32.mrf.mxu0
    %1906 = vdwg.mxu0
    %1907 = vmatpush.bf16.msra.mxu0 %v1518
    %1908 = vmatpush.bf16.msra.mxu0 %v1514
    %1909 = vmatpush.bf16.msra.mxu0 %v1510
    %1910 = vmatpush.bf16.msra.mxu0 %v1506
    %1911 = vmatpush.bf16.msra.mxu0 %v1502
    %1912 = vmatpush.bf16.msra.mxu0 %v1498
    %1913 = vmatpush.bf16.msra.mxu0 %v1494
    %1914 = vmatpush.bf16.msra.mxu0 %v1490
    %1915 = vmatmul.bf16.gmra.mxu0 %v293
    %v1916 = vpop.f32.mrf.mxu0
    %v1917 = vadd.f32 %v1904, %v1916
    %v1918 = vpop.f32.mrf.mxu0
    %1919 = vdwg.mxu0
    %1920 = vmatpush.bf16.msra.mxu0 %v1550
    %1921 = vmatpush.bf16.msra.mxu0 %v1546
    %1922 = vmatpush.bf16.msra.mxu0 %v1542
    %1923 = vmatpush.bf16.msra.mxu0 %v1538
    %1924 = vmatpush.bf16.msra.mxu0 %v1534
    %1925 = vmatpush.bf16.msra.mxu0 %v1530
    %1926 = vmatpush.bf16.msra.mxu0 %v1526
    %1927 = vmatpush.bf16.msra.mxu0 %v1522
    %1928 = vmatmul.bf16.gmra.mxu0 %v294
    %v1929 = vpop.f32.mrf.mxu0
    %v1930 = vadd.f32 %v1917, %v1929
    %v1931 = vpop.f32.mrf.mxu0
    %1932 = vdwg.mxu0
    %1933 = vmatpush.bf16.msra.mxu0 %v1582
    %1934 = vmatpush.bf16.msra.mxu0 %v1578
    %1935 = vmatpush.bf16.msra.mxu0 %v1574
    %1936 = vmatpush.bf16.msra.mxu0 %v1570
    %1937 = vmatpush.bf16.msra.mxu0 %v1566
    %1938 = vmatpush.bf16.msra.mxu0 %v1562
    %1939 = vmatpush.bf16.msra.mxu0 %v1558
    %1940 = vmatpush.bf16.msra.mxu0 %v1554
    %1941 = vmatmul.bf16.gmra.mxu0 %v295
    %v1942 = vpop.f32.mrf.mxu0
    %v1943 = vadd.f32 %v1930, %v1942
    %v1944 = vpop.f32.mrf.mxu0
    %1945 = vdwg.mxu0
    %1946 = vmatpush.bf16.msra.mxu0 %v1359
    %1947 = vmatpush.bf16.msra.mxu0 %v1355
    %1948 = vmatpush.bf16.msra.mxu0 %v1351
    %1949 = vmatpush.bf16.msra.mxu0 %v1347
    %1950 = vmatpush.bf16.msra.mxu0 %v1343
    %1951 = vmatpush.bf16.msra.mxu0 %v1339
    %1952 = vmatpush.bf16.msra.mxu0 %v1335
    %1953 = vmatpush.bf16.msra.mxu0 %v1331
    %1954 = vmatmul.bf16.gmra.mxu0 %v288
    %v1955 = vpop.f32.mrf.mxu0
    %v1956 = vadd.f32 %v555, %v1955
    %v1957 = vpop.f32.mrf.mxu0
    %1958 = vdwg.mxu0
    %1959 = vmatpush.bf16.msra.mxu0 %v1391
    %1960 = vmatpush.bf16.msra.mxu0 %v1387
    %1961 = vmatpush.bf16.msra.mxu0 %v1383
    %1962 = vmatpush.bf16.msra.mxu0 %v1379
    %1963 = vmatpush.bf16.msra.mxu0 %v1375
    %1964 = vmatpush.bf16.msra.mxu0 %v1371
    %1965 = vmatpush.bf16.msra.mxu0 %v1367
    %1966 = vmatpush.bf16.msra.mxu0 %v1363
    %1967 = vmatmul.bf16.gmra.mxu0 %v289
    %v1968 = vpop.f32.mrf.mxu0
    %v1969 = vadd.f32 %v1956, %v1968
    %v1970 = vpop.f32.mrf.mxu0
    %1971 = vdwg.mxu0
    %1972 = vmatpush.bf16.msra.mxu0 %v1423
    %1973 = vmatpush.bf16.msra.mxu0 %v1419
    %1974 = vmatpush.bf16.msra.mxu0 %v1415
    %1975 = vmatpush.bf16.msra.mxu0 %v1411
    %1976 = vmatpush.bf16.msra.mxu0 %v1407
    %1977 = vmatpush.bf16.msra.mxu0 %v1403
    %1978 = vmatpush.bf16.msra.mxu0 %v1399
    %1979 = vmatpush.bf16.msra.mxu0 %v1395
    %1980 = vmatmul.bf16.gmra.mxu0 %v290
    %v1981 = vpop.f32.mrf.mxu0
    %v1982 = vadd.f32 %v1969, %v1981
    %v1983 = vpop.f32.mrf.mxu0
    %1984 = vdwg.mxu0
    %1985 = vmatpush.bf16.msra.mxu0 %v1455
    %1986 = vmatpush.bf16.msra.mxu0 %v1451
    %1987 = vmatpush.bf16.msra.mxu0 %v1447
    %1988 = vmatpush.bf16.msra.mxu0 %v1443
    %1989 = vmatpush.bf16.msra.mxu0 %v1439
    %1990 = vmatpush.bf16.msra.mxu0 %v1435
    %1991 = vmatpush.bf16.msra.mxu0 %v1431
    %1992 = vmatpush.bf16.msra.mxu0 %v1427
    %1993 = vmatmul.bf16.gmra.mxu0 %v291
    %v1994 = vpop.f32.mrf.mxu0
    %v1995 = vadd.f32 %v1982, %v1994
    %v1996 = vpop.f32.mrf.mxu0
    %1997 = vdwg.mxu0
    %1998 = vmatpush.bf16.msra.mxu0 %v1487
    %1999 = vmatpush.bf16.msra.mxu0 %v1483
    %2000 = vmatpush.bf16.msra.mxu0 %v1479
    %2001 = vmatpush.bf16.msra.mxu0 %v1475
    %2002 = vmatpush.bf16.msra.mxu0 %v1471
    %2003 = vmatpush.bf16.msra.mxu0 %v1467
    %2004 = vmatpush.bf16.msra.mxu0 %v1463
    %2005 = vmatpush.bf16.msra.mxu0 %v1459
    %2006 = vmatmul.bf16.gmra.mxu0 %v292
    %v2007 = vpop.f32.mrf.mxu0
    %v2008 = vadd.f32 %v1995, %v2007
    %v2009 = vpop.f32.mrf.mxu0
    %2010 = vdwg.mxu0
    %2011 = vmatpush.bf16.msra.mxu0 %v1519
    %2012 = vmatpush.bf16.msra.mxu0 %v1515
    %2013 = vmatpush.bf16.msra.mxu0 %v1511
    %2014 = vmatpush.bf16.msra.mxu0 %v1507
    %2015 = vmatpush.bf16.msra.mxu0 %v1503
    %2016 = vmatpush.bf16.msra.mxu0 %v1499
    %2017 = vmatpush.bf16.msra.mxu0 %v1495
    %2018 = vmatpush.bf16.msra.mxu0 %v1491
    %2019 = vmatmul.bf16.gmra.mxu0 %v293
    %v2020 = vpop.f32.mrf.mxu0
    %v2021 = vadd.f32 %v2008, %v2020
    %v2022 = vpop.f32.mrf.mxu0
    %2023 = vdwg.mxu0
    %2024 = vmatpush.bf16.msra.mxu0 %v1551
    %2025 = vmatpush.bf16.msra.mxu0 %v1547
    %2026 = vmatpush.bf16.msra.mxu0 %v1543
    %2027 = vmatpush.bf16.msra.mxu0 %v1539
    %2028 = vmatpush.bf16.msra.mxu0 %v1535
    %2029 = vmatpush.bf16.msra.mxu0 %v1531
    %2030 = vmatpush.bf16.msra.mxu0 %v1527
    %2031 = vmatpush.bf16.msra.mxu0 %v1523
    %2032 = vmatmul.bf16.gmra.mxu0 %v294
    %v2033 = vpop.f32.mrf.mxu0
    %v2034 = vadd.f32 %v2021, %v2033
    %v2035 = vpop.f32.mrf.mxu0
    %2036 = vdwg.mxu0
    %2037 = vmatpush.bf16.msra.mxu0 %v1583
    %2038 = vmatpush.bf16.msra.mxu0 %v1579
    %2039 = vmatpush.bf16.msra.mxu0 %v1575
    %2040 = vmatpush.bf16.msra.mxu0 %v1571
    %2041 = vmatpush.bf16.msra.mxu0 %v1567
    %2042 = vmatpush.bf16.msra.mxu0 %v1563
    %2043 = vmatpush.bf16.msra.mxu0 %v1559
    %2044 = vmatpush.bf16.msra.mxu0 %v1555
    %2045 = vmatmul.bf16.gmra.mxu0 %v295
    %v2046 = vpop.f32.mrf.mxu0
    %v2047 = vadd.f32 %v2034, %v2046
    %v2048 = vpop.f32.mrf.mxu0
    %2049 = vdwg.mxu0
    %2050 = vmatpush.bf16.msra.mxu0 %v1360
    %2051 = vmatpush.bf16.msra.mxu0 %v1356
    %2052 = vmatpush.bf16.msra.mxu0 %v1352
    %2053 = vmatpush.bf16.msra.mxu0 %v1348
    %2054 = vmatpush.bf16.msra.mxu0 %v1344
    %2055 = vmatpush.bf16.msra.mxu0 %v1340
    %2056 = vmatpush.bf16.msra.mxu0 %v1336
    %2057 = vmatpush.bf16.msra.mxu0 %v1332
    %2058 = vmatmul.bf16.gmra.mxu0 %v288
    %v2059 = vpop.f32.mrf.mxu0
    %v2060 = vadd.f32 %v556, %v2059
    %v2061 = vpop.f32.mrf.mxu0
    %2062 = vdwg.mxu0
    %2063 = vmatpush.bf16.msra.mxu0 %v1392
    %2064 = vmatpush.bf16.msra.mxu0 %v1388
    %2065 = vmatpush.bf16.msra.mxu0 %v1384
    %2066 = vmatpush.bf16.msra.mxu0 %v1380
    %2067 = vmatpush.bf16.msra.mxu0 %v1376
    %2068 = vmatpush.bf16.msra.mxu0 %v1372
    %2069 = vmatpush.bf16.msra.mxu0 %v1368
    %2070 = vmatpush.bf16.msra.mxu0 %v1364
    %2071 = vmatmul.bf16.gmra.mxu0 %v289
    %v2072 = vpop.f32.mrf.mxu0
    %v2073 = vadd.f32 %v2060, %v2072
    %v2074 = vpop.f32.mrf.mxu0
    %2075 = vdwg.mxu0
    %2076 = vmatpush.bf16.msra.mxu0 %v1424
    %2077 = vmatpush.bf16.msra.mxu0 %v1420
    %2078 = vmatpush.bf16.msra.mxu0 %v1416
    %2079 = vmatpush.bf16.msra.mxu0 %v1412
    %2080 = vmatpush.bf16.msra.mxu0 %v1408
    %2081 = vmatpush.bf16.msra.mxu0 %v1404
    %2082 = vmatpush.bf16.msra.mxu0 %v1400
    %2083 = vmatpush.bf16.msra.mxu0 %v1396
    %2084 = vmatmul.bf16.gmra.mxu0 %v290
    %v2085 = vpop.f32.mrf.mxu0
    %v2086 = vadd.f32 %v2073, %v2085
    %v2087 = vpop.f32.mrf.mxu0
    %2088 = vdwg.mxu0
    %2089 = vmatpush.bf16.msra.mxu0 %v1456
    %2090 = vmatpush.bf16.msra.mxu0 %v1452
    %2091 = vmatpush.bf16.msra.mxu0 %v1448
    %2092 = vmatpush.bf16.msra.mxu0 %v1444
    %2093 = vmatpush.bf16.msra.mxu0 %v1440
    %2094 = vmatpush.bf16.msra.mxu0 %v1436
    %2095 = vmatpush.bf16.msra.mxu0 %v1432
    %2096 = vmatpush.bf16.msra.mxu0 %v1428
    %2097 = vmatmul.bf16.gmra.mxu0 %v291
    %v2098 = vpop.f32.mrf.mxu0
    %v2099 = vadd.f32 %v2086, %v2098
    %v2100 = vpop.f32.mrf.mxu0
    %2101 = vdwg.mxu0
    %2102 = vmatpush.bf16.msra.mxu0 %v1488
    %2103 = vmatpush.bf16.msra.mxu0 %v1484
    %2104 = vmatpush.bf16.msra.mxu0 %v1480
    %2105 = vmatpush.bf16.msra.mxu0 %v1476
    %2106 = vmatpush.bf16.msra.mxu0 %v1472
    %2107 = vmatpush.bf16.msra.mxu0 %v1468
    %2108 = vmatpush.bf16.msra.mxu0 %v1464
    %2109 = vmatpush.bf16.msra.mxu0 %v1460
    %2110 = vmatmul.bf16.gmra.mxu0 %v292
    %v2111 = vpop.f32.mrf.mxu0
    %v2112 = vadd.f32 %v2099, %v2111
    %v2113 = vpop.f32.mrf.mxu0
    %2114 = vdwg.mxu0
    %2115 = vmatpush.bf16.msra.mxu0 %v1520
    %2116 = vmatpush.bf16.msra.mxu0 %v1516
    %2117 = vmatpush.bf16.msra.mxu0 %v1512
    %2118 = vmatpush.bf16.msra.mxu0 %v1508
    %2119 = vmatpush.bf16.msra.mxu0 %v1504
    %2120 = vmatpush.bf16.msra.mxu0 %v1500
    %2121 = vmatpush.bf16.msra.mxu0 %v1496
    %2122 = vmatpush.bf16.msra.mxu0 %v1492
    %2123 = vmatmul.bf16.gmra.mxu0 %v293
    %v2124 = vpop.f32.mrf.mxu0
    %v2125 = vadd.f32 %v2112, %v2124
    %v2126 = vpop.f32.mrf.mxu0
    %2127 = vdwg.mxu0
    %2128 = vmatpush.bf16.msra.mxu0 %v1552
    %2129 = vmatpush.bf16.msra.mxu0 %v1548
    %2130 = vmatpush.bf16.msra.mxu0 %v1544
    %2131 = vmatpush.bf16.msra.mxu0 %v1540
    %2132 = vmatpush.bf16.msra.mxu0 %v1536
    %2133 = vmatpush.bf16.msra.mxu0 %v1532
    %2134 = vmatpush.bf16.msra.mxu0 %v1528
    %2135 = vmatpush.bf16.msra.mxu0 %v1524
    %2136 = vmatmul.bf16.gmra.mxu0 %v294
    %v2137 = vpop.f32.mrf.mxu0
    %v2138 = vadd.f32 %v2125, %v2137
    %v2139 = vpop.f32.mrf.mxu0
    %2140 = vdwg.mxu0
    %2141 = vmatpush.bf16.msra.mxu0 %v1584
    %2142 = vmatpush.bf16.msra.mxu0 %v1580
    %2143 = vmatpush.bf16.msra.mxu0 %v1576
    %2144 = vmatpush.bf16.msra.mxu0 %v1572
    %2145 = vmatpush.bf16.msra.mxu0 %v1568
    %2146 = vmatpush.bf16.msra.mxu0 %v1564
    %2147 = vmatpush.bf16.msra.mxu0 %v1560
    %2148 = vmatpush.bf16.msra.mxu0 %v1556
    %2149 = vmatmul.bf16.gmra.mxu0 %v295
    %v2150 = vpop.f32.mrf.mxu0
    %v2151 = vadd.f32 %v2138, %v2150
    %v2152 = vpop.f32.mrf.mxu0
    %2153 = vdwg.mxu0
    %2154 = vmatpush.bf16.msra.mxu0 %v1361
    %2155 = vmatpush.bf16.msra.mxu0 %v1357
    %2156 = vmatpush.bf16.msra.mxu0 %v1353
    %2157 = vmatpush.bf16.msra.mxu0 %v1349
    %2158 = vmatpush.bf16.msra.mxu0 %v1345
    %2159 = vmatpush.bf16.msra.mxu0 %v1341
    %2160 = vmatpush.bf16.msra.mxu0 %v1337
    %2161 = vmatpush.bf16.msra.mxu0 %v1333
    %2162 = vmatmul.bf16.gmra.mxu0 %v288
    %v2163 = vpop.f32.mrf.mxu0
    %v2164 = vadd.f32 %v557, %v2163
    %v2165 = vpop.f32.mrf.mxu0
    %2166 = vdwg.mxu0
    %2167 = vmatpush.bf16.msra.mxu0 %v1393
    %2168 = vmatpush.bf16.msra.mxu0 %v1389
    %2169 = vmatpush.bf16.msra.mxu0 %v1385
    %2170 = vmatpush.bf16.msra.mxu0 %v1381
    %2171 = vmatpush.bf16.msra.mxu0 %v1377
    %2172 = vmatpush.bf16.msra.mxu0 %v1373
    %2173 = vmatpush.bf16.msra.mxu0 %v1369
    %2174 = vmatpush.bf16.msra.mxu0 %v1365
    %2175 = vmatmul.bf16.gmra.mxu0 %v289
    %v2176 = vpop.f32.mrf.mxu0
    %v2177 = vadd.f32 %v2164, %v2176
    %v2178 = vpop.f32.mrf.mxu0
    %2179 = vdwg.mxu0
    %2180 = vmatpush.bf16.msra.mxu0 %v1425
    %2181 = vmatpush.bf16.msra.mxu0 %v1421
    %2182 = vmatpush.bf16.msra.mxu0 %v1417
    %2183 = vmatpush.bf16.msra.mxu0 %v1413
    %2184 = vmatpush.bf16.msra.mxu0 %v1409
    %2185 = vmatpush.bf16.msra.mxu0 %v1405
    %2186 = vmatpush.bf16.msra.mxu0 %v1401
    %2187 = vmatpush.bf16.msra.mxu0 %v1397
    %2188 = vmatmul.bf16.gmra.mxu0 %v290
    %v2189 = vpop.f32.mrf.mxu0
    %v2190 = vadd.f32 %v2177, %v2189
    %v2191 = vpop.f32.mrf.mxu0
    %2192 = vdwg.mxu0
    %2193 = vmatpush.bf16.msra.mxu0 %v1457
    %2194 = vmatpush.bf16.msra.mxu0 %v1453
    %2195 = vmatpush.bf16.msra.mxu0 %v1449
    %2196 = vmatpush.bf16.msra.mxu0 %v1445
    %2197 = vmatpush.bf16.msra.mxu0 %v1441
    %2198 = vmatpush.bf16.msra.mxu0 %v1437
    %2199 = vmatpush.bf16.msra.mxu0 %v1433
    %2200 = vmatpush.bf16.msra.mxu0 %v1429
    %2201 = vmatmul.bf16.gmra.mxu0 %v291
    %v2202 = vpop.f32.mrf.mxu0
    %v2203 = vadd.f32 %v2190, %v2202
    %v2204 = vpop.f32.mrf.mxu0
    %2205 = vdwg.mxu0
    %2206 = vmatpush.bf16.msra.mxu0 %v1489
    %2207 = vmatpush.bf16.msra.mxu0 %v1485
    %2208 = vmatpush.bf16.msra.mxu0 %v1481
    %2209 = vmatpush.bf16.msra.mxu0 %v1477
    %2210 = vmatpush.bf16.msra.mxu0 %v1473
    %2211 = vmatpush.bf16.msra.mxu0 %v1469
    %2212 = vmatpush.bf16.msra.mxu0 %v1465
    %2213 = vmatpush.bf16.msra.mxu0 %v1461
    %2214 = vmatmul.bf16.gmra.mxu0 %v292
    %v2215 = vpop.f32.mrf.mxu0
    %v2216 = vadd.f32 %v2203, %v2215
    %v2217 = vpop.f32.mrf.mxu0
    %2218 = vdwg.mxu0
    %2219 = vmatpush.bf16.msra.mxu0 %v1521
    %2220 = vmatpush.bf16.msra.mxu0 %v1517
    %2221 = vmatpush.bf16.msra.mxu0 %v1513
    %2222 = vmatpush.bf16.msra.mxu0 %v1509
    %2223 = vmatpush.bf16.msra.mxu0 %v1505
    %2224 = vmatpush.bf16.msra.mxu0 %v1501
    %2225 = vmatpush.bf16.msra.mxu0 %v1497
    %2226 = vmatpush.bf16.msra.mxu0 %v1493
    %2227 = vmatmul.bf16.gmra.mxu0 %v293
    %v2228 = vpop.f32.mrf.mxu0
    %v2229 = vadd.f32 %v2216, %v2228
    %v2230 = vpop.f32.mrf.mxu0
    %2231 = vdwg.mxu0
    %2232 = vmatpush.bf16.msra.mxu0 %v1553
    %2233 = vmatpush.bf16.msra.mxu0 %v1549
    %2234 = vmatpush.bf16.msra.mxu0 %v1545
    %2235 = vmatpush.bf16.msra.mxu0 %v1541
    %2236 = vmatpush.bf16.msra.mxu0 %v1537
    %2237 = vmatpush.bf16.msra.mxu0 %v1533
    %2238 = vmatpush.bf16.msra.mxu0 %v1529
    %2239 = vmatpush.bf16.msra.mxu0 %v1525
    %2240 = vmatmul.bf16.gmra.mxu0 %v294
    %v2241 = vpop.f32.mrf.mxu0
    %v2242 = vadd.f32 %v2229, %v2241
    %v2243 = vpop.f32.mrf.mxu0
    %2244 = vdwg.mxu0
    %2245 = vmatpush.bf16.msra.mxu0 %v1585
    %2246 = vmatpush.bf16.msra.mxu0 %v1581
    %2247 = vmatpush.bf16.msra.mxu0 %v1577
    %2248 = vmatpush.bf16.msra.mxu0 %v1573
    %2249 = vmatpush.bf16.msra.mxu0 %v1569
    %2250 = vmatpush.bf16.msra.mxu0 %v1565
    %2251 = vmatpush.bf16.msra.mxu0 %v1561
    %2252 = vmatpush.bf16.msra.mxu0 %v1557
    %2253 = vmatmul.bf16.gmra.mxu0 %v295
    %v2254 = vpop.f32.mrf.mxu0
    %v2255 = vadd.f32 %v2242, %v2254
    %v2256 = vpop.f32.mrf.mxu0
    %2257 = vdwg.mxu0
    %v2258 = vmax.f32 %v1943, 0.0
    %v2259 = vmax.f32 %v2047, 0.0
    %v2260 = vmax.f32 %v2151, 0.0
    %v2261 = vmax.f32 %v2255, 0.0
    %v2262 = vld [vmem:[%s5] sm:$0xf]
    %v2264 = vperm.slane %v2262, 0
    %v2265 = vperm.slane %v2262, 1
    %v2266 = vperm.slane %v2262, 2
    %v2267 = vperm.slane %v2262, 3
    %v2272 = vmul.f32 %v2258, %v2264
    %v2273 = vmul.f32 %v2259, %v2265
    %v2274 = vmul.f32 %v2260, %v2266
    %v2275 = vmul.f32 %v2261, %v2267
    %v2276 = vadd.f32 %v2272, %v2273
    %v2277 = vadd.f32 %v2276, %v2274
    %v2278 = vadd.f32 %v2277, %v2275
    %2279 = vadd.xlane.f32.xlu0 %v2278
    %v2280 = vpop.xlane.xlu0 %2279
    %s2281 = sld [smem:[#allocation2]]
    %v2282 = vstv %s2281
    %v2283 = vadd.f32 %v2280, %v2282
    %vm2284 = vcmask 7168
    %2285 = vst.msk [vmem:[%s7] sm:$0xff] %vm2284, %v2283
    // Predicated region
    $region38: #{tpu_custom_call.1} parent=1 // pred_check
      _
    $region39: #{tpu_custom_call.1} parent=1 // pred_check_branch
      %2287 = sbr.rel (0) target = $region41
    $region40: #{tpu_custom_call.1} parent=1 // pred_region
      _
    $region41: #{tpu_custom_call.1} parent=1 // pred_fallthru
      _
    // Predicated region
    $region42: #{tpu_custom_call.1} parent=1 // pred_check
      _
    $region43: #{tpu_custom_call.1} parent=1 // pred_check_branch
      %2289 = sbr.rel (0) target = $region45
    $region44: #{tpu_custom_call.1} parent=1 // pred_region
      _
    $region45: #{tpu_custom_call.1} parent=1 // pred_fallthru
      _
    %2290 = vsyncpa [#allocation4], 1
    %2291 = vsyncpa [#allocation6], 1

</llo_original>
